<compile_context>
chip_gen: v7x
topology: tpu7x:2x2x1
jax: 0.10.0
libtpu: 0.0.40
codegen_flags: <defaults>
</compile_context>

<pallas_src>
import functools

import jax
import jax.numpy as jnp
import numpy as np
from jax.experimental import pallas as pl
from jax.experimental.pallas import tpu as pltpu

CLOTH_TYPES = ["uppercloth", "coat", "pants", "skirts", "hair", "shoes"]
INPUT_FEAT_DIM = 2048
OUT_PAD = 128  # lane-aligned fused output width (>= TOTAL_OUT); keep at 128


def _head_layout():
    """Column layout of the fused output: list of (name, width, offset)."""
    layout = []
    off = 0
    for ct in CLOTH_TYPES:
        if ct != "shoes":
            layout.append((f"z_cut_{ct}", 6, off)); off += 6
            layout.append((f"z_style_{ct}", 12, off)); off += 12
        else:
            layout.append(("z_style_shoes", 4, off)); off += 4
    layout.append(("cloth_cls", len(CLOTH_TYPES), off)); off += len(CLOTH_TYPES)
    layout.append(("gender_cls", 2, off)); off += 2
    assert off <= OUT_PAD
    return layout, off


HEAD_LAYOUT, TOTAL_OUT = _head_layout()


def init_params(key):
    """Init mimicking PyTorch nn.Linear default (U[-1/sqrt(in), 1/sqrt(in)]).

    Returns a fused weight (C, OUT_PAD) in bfloat16 (the dominant parameter
    stream) and a fused bias (1, OUT_PAD) in float32; padded columns are zero.
    """
    w = jnp.zeros((INPUT_FEAT_DIM, OUT_PAD), jnp.float32)
    b = jnp.zeros((1, OUT_PAD), jnp.float32)
    bound = 1.0 / (INPUT_FEAT_DIM ** 0.5)
    for name, width, off in HEAD_LAYOUT:
        key, kw, kb = jax.random.split(key, 3)
        w_head = jax.random.uniform(
            kw, (INPUT_FEAT_DIM, width), jnp.float32, -bound, bound)
        b_head = jax.random.uniform(kb, (1, width), jnp.float32, -bound, bound)
        w = w.at[:, off:off + width].set(w_head)
        b = b.at[:, off:off + width].set(b_head)
    return w.astype(jnp.bfloat16), b


def clothnet_kernel(x_ref, w_ref, b_ref, o_ref, acc_ref, *, inv_hw):
    # x_ref : (Bt, HWt, C)  bf16 (or f32), lane-dense over C
    # w_ref : (C, OUT_PAD)  bf16      b_ref : (1, OUT_PAD) f32
    # o_ref : (Bt, OUT_PAD) f32       acc_ref: (Bt, C) f32 pooled-sum scratch
    k = pl.program_id(1)

    @pl.when(k == 0)
    def _init():
        acc_ref[...] = jnp.zeros_like(acc_ref)

    # Spatial-sum accumulate in f32 (sublane reduce; x streams as bf16).
    acc_ref[...] += jnp.sum(x_ref[...].astype(jnp.float32), axis=1)

    @pl.when(k == pl.num_programs(1) - 1)
    def _finalize():
        pooled = acc_ref[...].astype(jnp.bfloat16)          # (Bt, C) -> MXU
        logits = jnp.dot(pooled, w_ref[...],
                         preferred_element_type=jnp.float32)
        # Fold the 1/HW pooling scale into the narrow (Bt, 128) epilogue.
        o_ref[...] = logits * inv_hw + b_ref[...]


def _choose_tiling(B, HW, x_itemsize):
    """Pick (batch_tile, hw_tile, vmem_limit_bytes) from the generation's VMEM."""
    C = INPUT_FEAT_DIM
    try:
        vmem_cap = int(pltpu.get_tpu_info().vmem_capacity_bytes)
    except Exception:
        vmem_cap = 64 * 1024 * 1024          # conservative: v7x per-TC VMEM

    # Scoped-VMEM request: ~75% of physical, capped at ~100 MiB.
    #   v5e/v6e (128 MiB physical) -> ~96 MiB;  v7x (64 MiB) -> ~48 MiB.
    vmem_limit = int(min(vmem_cap * 3 // 4, 100 * 1024 * 1024))

    # Pinned weight + bias (double-buffered by the pipeline) + slack for
    # compiler scratch / output staging.
    fixed = 2 * (C * OUT_PAD * 2 + OUT_PAD * 4) + (1 << 20)
    budget = vmem_limit - fixed

    def per_row(hw_t):
        return (2 * hw_t * C * x_itemsize    # x block, double-buffered
                + hw_t * C * 4               # f32 upcast transient in the reduce
                + C * 4                      # f32 pooled-sum accumulator
                + 2 * OUT_PAD * 4)           # output block, double-buffered

    # Prefer keeping the whole spatial extent in one block; only tile HW (with
    # an exact 8-aligned divisor so no padded rows enter the reduction) when
    # even an 8-row batch tile would not fit (high-res features on v7x).
    hw_t = HW
    if 8 * per_row(HW) > budget:
        cands = [d for d in range(HW, 7, -1)
                 if HW % d == 0 and d % 8 == 0 and 8 * per_row(d) <= budget]
        hw_t = cands[0] if cands else HW

    bt = max(8, (budget // per_row(hw_t)) // 8 * 8)
    bt = min(bt, 256)                        # mem-bound: nothing gained beyond this
    if bt >= 128:
        bt = (bt // 128) * 128               # MXU-row alignment once large
    if B >= 64:
        # Keep >= 2 batch blocks so the "parallel" axis can shard across both
        # v7x TensorCores (costs only one extra ~0.35us step on 1-TC chips).
        bt = min(bt, ((pl.cdiv(B, 2) + 7) // 8) * 8)
    bt = B if B <= 8 else min(bt, ((B + 7) // 8) * 8)
    return bt, hw_t, vmem_limit


def _split_heads(logits, batch_size):
    heads = {name: logits[:, off:off + width]
             for name, width, off in HEAD_LAYOUT}
    z_cuts, z_styles = [], []
    for ct in CLOTH_TYPES:
        if ct != "shoes":
            z_cuts.append(heads[f"z_cut_{ct}"])
            z_styles.append(heads[f"z_style_{ct}"])
        else:
            # torch.zeros((batch_size, 0)).float() equivalent
            z_cuts.append(jnp.zeros((batch_size, 0), jnp.float32))
            z_styles.append(heads["z_style_shoes"])
    scores = jax.nn.sigmoid(heads["cloth_cls"])
    genders = jax.nn.softmax(heads["gender_cls"], axis=-1)
    return genders, scores, z_cuts, z_styles


@jax.jit
def clothnet_forward(img_feat, w_fused, b_fused):
    """img_feat: channels-last backbone feature (B, H, W, C), bf16 preferred."""
    B, H, W, C = img_feat.shape
    assert C == INPUT_FEAT_DIM
    HW = H * W
    x = img_feat.reshape(B, HW, C)           # free reshape, no transpose

    bt, hw_t, vmem_limit = _choose_tiling(B, HW, x.dtype.itemsize)
    grid = (pl.cdiv(B, bt), pl.cdiv(HW, hw_t))

    x_bytes = x.size * x.dtype.itemsize
    cost = pl.CostEstimate(
        flops=2 * B * C * OUT_PAD + B * HW * C,
        transcendentals=0,
        bytes_accessed=(x_bytes + w_fused.size * w_fused.dtype.itemsize
                        + b_fused.size * 4 + B * OUT_PAD * 4),
    )

    kernel = functools.partial(clothnet_kernel, inv_hw=1.0 / HW)
    logits = pl.pallas_call(
        kernel,
        out_shape=jax.ShapeDtypeStruct((B, OUT_PAD), jnp.float32),
        grid=grid,
        in_specs=[
            pl.BlockSpec((bt, hw_t, C), lambda i, k: (i, k, 0)),
            # Weight / bias blocks are pinned (constant index map) and resident.
            pl.BlockSpec((C, OUT_PAD), lambda i, k: (0, 0)),
            pl.BlockSpec((1, OUT_PAD), lambda i, k: (0, 0)),
        ],
        out_specs=pl.BlockSpec((bt, OUT_PAD), lambda i, k: (i, 0)),
        scratch_shapes=[pltpu.VMEM((bt, INPUT_FEAT_DIM), jnp.float32)],
        compiler_params=pltpu.CompilerParams(
            dimension_semantics=("parallel", "arbitrary"),
            vmem_limit_bytes=vmem_limit,
        ),
        cost_estimate=cost,
    )(x, w_fused, b_fused)

    return _split_heads(logits, B)


def clothnet_reference(img_feat, w_fused, b_fused):
    """Plain-JAX reference of the same math (same bf16 params / bf16 feature)."""
    B = img_feat.shape[0]
    pooled = img_feat.astype(jnp.float32).mean(axis=(1, 2))       # (B, C) f32
    logits = jnp.dot(pooled.astype(jnp.bfloat16), w_fused,
                     preferred_element_type=jnp.float32) + b_fused
    return _split_heads(logits, B)


if __name__ == "__main__":
    # Small but consistent shapes: the linear heads fix C=2048; keep spatial small.
    B, H, W, C = 2, 4, 4, INPUT_FEAT_DIM

    key = jax.random.PRNGKey(0)
    # Backbone feature in channels-last (natural JAX/TPU) layout, streamed bf16.
    x = jax.random.normal(key, (B, H, W, C), jnp.float32).astype(jnp.bfloat16)
    w_fused, b_fused = init_params(jax.random.PRNGKey(42))

    outs = clothnet_forward(x, w_fused, b_fused)
    jax.block_until_ready(outs)
    genders, scores, z_cuts, z_styles = outs

    # Correctness check against plain-JAX reference (same bf16 params/feature).
    g_ref, s_ref, zc_ref, zs_ref = clothnet_reference(x, w_fused, b_fused)
    np.testing.assert_allclose(np.asarray(genders), np.asarray(g_ref),
                               rtol=1e-3, atol=1e-3)
    np.testing.assert_allclose(np.asarray(scores), np.asarray(s_ref),
                               rtol=1e-3, atol=1e-3)
    for a, b in zip(z_cuts, zc_ref):
        np.testing.assert_allclose(np.asarray(a), np.asarray(b),
                                   rtol=1e-3, atol=1e-3)
    for a, b in zip(z_styles, zs_ref):
        np.testing.assert_allclose(np.asarray(a), np.asarray(b),
                                   rtol=1e-3, atol=1e-3)

    # Sanity on shapes / semantics.
    assert genders.shape == (B, 2) and scores.shape == (B, len(CLOTH_TYPES))
    assert z_cuts[-1].shape == (B, 0)   # shoes: empty z_cut, like torch.zeros((B, 0))
    assert all(z.shape == (B, 6) for z in z_cuts[:-1])
    assert z_styles[-1].shape == (B, 4)
    assert all(z.shape == (B, 12) for z in z_styles[:-1])

    print("KERNEL_OK")
</pallas_src>

<mosaic_0001>
module attributes {stable_mosaic.version = 11 : i64} {
  func.func @clothnet_kernel(%arg0: i32, %arg1: i32, %arg2: memref<2x16x2048xbf16, #tpu.memory_space<vmem>>, %arg3: memref<2048x128xbf16, #tpu.memory_space<vmem>>, %arg4: memref<1x128xf32, #tpu.memory_space<vmem>>, %arg5: memref<2x128xf32, #tpu.memory_space<vmem>>, %arg6: memref<2x2048xf32, #tpu.memory_space<vmem>>) attributes {dimension_semantics = [#tpu.dimension_semantics<parallel>, #tpu.dimension_semantics<arbitrary>], iteration_bounds = array<i64: 1, 1>, scalar_prefetch = 0 : i64, scratch_operands = 1 : i64, tpu.core_type = #tpu.core_type<tc>, window_params = [{transform_indices = @transform_0, window_bounds = array<i64: 2, 16, 2048>}, {pipeline_mode = #tpu.pipeline_mode<synchronous>, transform_indices = @transform_1, window_bounds = array<i64: 2048, 128>}, {pipeline_mode = #tpu.pipeline_mode<synchronous>, transform_indices = @transform_2, window_bounds = array<i64: 1, 128>}, {transform_indices = @transform_3, window_bounds = array<i64: 2, 128>}]} {
    %c0_i32 = arith.constant 0 : i32
    %0 = arith.cmpi eq, %arg1, %c0_i32 : i32
    %1 = arith.extui %0 : i1 to i32
    %c0_i32_0 = arith.constant 0 : i32
    %2 = arith.cmpi ne, %1, %c0_i32_0 : i32
    scf.if %2 {
      %cst_9 = arith.constant 0.000000e+00 : f32
      %12 = vector.broadcast %cst_9 : f32 to vector<2x2048xf32>
      %c0_10 = arith.constant 0 : index
      %c0_11 = arith.constant 0 : index
      %13 = vector.load %arg6[%c0_10, %c0_11] : memref<2x2048xf32, #tpu.memory_space<vmem>>, vector<2x2048xf32>
      tpu.vector_store %arg6[%c0_10, %c0_11], %12 {strides = array<i32>} : memref<2x2048xf32, #tpu.memory_space<vmem>>, vector<2x2048xf32>,
    } else {
    }
    %c0 = arith.constant 0 : index
    %c0_1 = arith.constant 0 : index
    %3 = vector.load %arg6[%c0, %c0_1] : memref<2x2048xf32, #tpu.memory_space<vmem>>, vector<2x2048xf32>
    %c0_2 = arith.constant 0 : index
    %c0_3 = arith.constant 0 : index
    %c0_4 = arith.constant 0 : index
    %4 = vector.load %arg2[%c0_2, %c0_3, %c0_4] : memref<2x16x2048xbf16, #tpu.memory_space<vmem>>, vector<2x16x2048xbf16>
    %5 = arith.extf %4 : vector<2x16x2048xbf16> to vector<2x16x2048xf32>
    %cst = arith.constant dense<0.000000e+00> : vector<2x2048xf32>
    %6 = vector.multi_reduction <add>, %5, %cst [1] : vector<2x16x2048xf32> to vector<2x2048xf32>
    %7 = arith.addf %3, %6 : vector<2x2048xf32>
    %c0_5 = arith.constant 0 : index
    %c0_6 = arith.constant 0 : index
    %8 = vector.load %arg6[%c0_5, %c0_6] : memref<2x2048xf32, #tpu.memory_space<vmem>>, vector<2x2048xf32>
    tpu.vector_store %arg6[%c0_5, %c0_6], %7 {strides = array<i32>} : memref<2x2048xf32, #tpu.memory_space<vmem>>, vector<2x2048xf32>,
    %c0_i32_7 = arith.constant 0 : i32
    %9 = arith.cmpi eq, %arg1, %c0_i32_7 : i32
    %10 = arith.extui %9 : i1 to i32
    %c0_i32_8 = arith.constant 0 : i32
    %11 = arith.cmpi ne, %10, %c0_i32_8 : i32
    scf.if %11 {
      %c0_9 = arith.constant 0 : index
      %c0_10 = arith.constant 0 : index
      %12 = vector.load %arg6[%c0_9, %c0_10] : memref<2x2048xf32, #tpu.memory_space<vmem>>, vector<2x2048xf32>
      %13 = arith.truncf %12 : vector<2x2048xf32> to vector<2x2048xbf16>
      %c0_11 = arith.constant 0 : index
      %c0_12 = arith.constant 0 : index
      %14 = vector.load %arg3[%c0_11, %c0_12] : memref<2048x128xbf16, #tpu.memory_space<vmem>>, vector<2048x128xbf16>
      %cst_13 = arith.constant dense<0.000000e+00> : vector<2x128xf32>
      %15 = tpu.matmul %13, %14, %cst_13 {dimension_numbers = #tpu.dot_dimension_numbers<[1], [0], [0], [1], [0, 0, 1, 1], [], []>} : vector<2x2048xbf16>, vector<2048x128xbf16>, vector<2x128xf32> -> vector<2x128xf32>
      %cst_14 = arith.constant 6.250000e-02 : f32
      %16 = vector.broadcast %cst_14 : f32 to vector<2x128xf32>
      %17 = arith.mulf %15, %16 : vector<2x128xf32>
      %c0_15 = arith.constant 0 : index
      %c0_16 = arith.constant 0 : index
      %18 = vector.load %arg4[%c0_15, %c0_16] : memref<1x128xf32, #tpu.memory_space<vmem>>, vector<1x128xf32>
      %19 = vector.broadcast %18 : vector<1x128xf32> to vector<2x128xf32>
      %20 = arith.addf %17, %19 : vector<2x128xf32>
      %c0_17 = arith.constant 0 : index
      %c0_18 = arith.constant 0 : index
      %21 = vector.load %arg5[%c0_17, %c0_18] : memref<2x128xf32, #tpu.memory_space<vmem>>, vector<2x128xf32>
      tpu.vector_store %arg5[%c0_17, %c0_18], %20 {strides = array<i32>} : memref<2x128xf32, #tpu.memory_space<vmem>>, vector<2x128xf32>,
    } else {
    }
    return
  }
  func.func @transform_0(%arg0: i32, %arg1: i32) -> (i32, i32, i32) {
    %c0_i32 = arith.constant 0 : i32
    %c0_i32_0 = arith.constant 0 : i32
    return %arg0, %arg1, %c0_i32 : i32, i32, i32
  }
  func.func @transform_1(%arg0: i32, %arg1: i32) -> (i32, i32) {
    %c0_i32 = arith.constant 0 : i32
    %c0_i32_0 = arith.constant 0 : i32
    %c0_i32_1 = arith.constant 0 : i32
    return %c0_i32, %c0_i32_0 : i32, i32
  }
  func.func @transform_2(%arg0: i32, %arg1: i32) -> (i32, i32) {
    %c0_i32 = arith.constant 0 : i32
    %c0_i32_0 = arith.constant 0 : i32
    %c0_i32_1 = arith.constant 0 : i32
    return %c0_i32, %c0_i32_0 : i32, i32
  }
  func.func @transform_3(%arg0: i32, %arg1: i32) -> (i32, i32) {
    %c0_i32 = arith.constant 0 : i32
    %c0_i32_0 = arith.constant 0 : i32
    return %arg0, %c0_i32 : i32, i32
  }
}

</mosaic_0001>

<llo_original>
// kernel: clothnet_forward.1
$region0: #{clothnet_forward.1}
  #allocation0 [shape = 'u32[]', space=smem, size = 0x4, offset = 0x4, fixed_abs, tag = 'smem constant byte address 0x4 - core index']
  #allocation1 [shape = 'u32[144,128]{1,0:T(1,128)}', space=vmem, size = 0x12000, scoped, tag = 'internal scratch']
  #allocation2 [shape = 'f32[2,2048]{1,0:T(2,128)}', space=vmem, size = 0x4000, scoped, tag = 'scratch operand']
  %s0 = inlined_call_operand.vmem [shape: bf16[2,16,2048], index: 0, kind: input, shape index: {}]
  %s1 = inlined_call_operand.hbm [shape: bf16[2048,128], index: 1, kind: input, shape index: {}]
  %s2 = inlined_call_operand.vmem [shape: f32[1,128], index: 2, kind: input, shape index: {}]
  %s3 = inlined_call_operand.vmem [shape: f32[2,128], index: 3, kind: output, shape index: {}]
  %s4 = sld [smem:[#allocation0]]
  $region34: #{clothnet_forward.1} parent=0
    _
  %s6 = ssub.s32 1, %s4
  %s7 = scalar_select 0, %s6, %s4
  $region1: #{clothnet_forward.1} parent=0
    #allocation3 [shape = 'u8[524288]{0}', space=vmem, size = 0x80000, scoped, tag = 'input window, operand 1, single buffered']
    #allocation4 [shape = 's32[1]{0}', space=sflag, size = 0x4, scoped, tag = 'scoped memory for clothnet_forward.1']
    %8 = vsyncpa [#allocation4], 0
    // Predicated region
    $region2: #{clothnet_forward.1} parent=1 // pred_check
      _
    $region3: #{clothnet_forward.1} parent=1 // pred_check_branch
      %10 = sbr.rel (0) target = $region5
    $region4: #{clothnet_forward.1} parent=1 // pred_region
      _
    $region5: #{clothnet_forward.1} parent=1 // pred_fallthru
      _
    // Predicated region
    $region6: #{clothnet_forward.1} parent=1 // pred_check
      _
    $region7: #{clothnet_forward.1} parent=1 // pred_check_branch
      %12 = sbr.rel (0) target = $region9
    $region8: #{clothnet_forward.1} parent=1 // pred_region
      %s14 = ssub.s32 16384, 16384
      %15 = vsyncadd [#allocation4], %s14
      %s16 = sshll.u32 [#allocation3], 4
      %s17 = int_to_ptr.vmem [resolvable:$true] %s16
      %22 = dma.hbm_to_vmem [thread:$0]  %s1, 16384, %s17, [#allocation4], 64, 64, 4
    $region9: #{clothnet_forward.1} parent=1 // pred_fallthru
      _
    // Predicated region
    $region10: #{clothnet_forward.1} parent=1 // pred_check
      _
    $region11: #{clothnet_forward.1} parent=1 // pred_check_branch
      %24 = sbr.rel (0) target = $region13
    $region12: #{clothnet_forward.1} parent=1 // pred_region
      _
    $region13: #{clothnet_forward.1} parent=1 // pred_fallthru
      _
    // Predicated region
    $region14: #{clothnet_forward.1} parent=1 // pred_check
      _
    $region15: #{clothnet_forward.1} parent=1 // pred_check_branch
      %26 = sbr.rel (0) target = $region17
    $region16: #{clothnet_forward.1} parent=1 // pred_region
      %27 = dma.done [#allocation4], 16384
    $region17: #{clothnet_forward.1} parent=1 // pred_fallthru
      _
    %p29 = scmp.eq.s32.totalorder 0, 0
    // Predicated region
    $region18: #{clothnet_forward.1} parent=1 // pred_check
      %p30 = pneg %p29
    $region19: #{clothnet_forward.1} parent=1 // pred_check_branch
      %32 = sbr.rel (%p30) target = $region21
    $region20: #{clothnet_forward.1} parent=1 // pred_region
      %33 = vst [vmem:[#allocation2] sm:$0xff] 0.0
      %34 = vst [vmem:[#allocation2 + $0x8] sm:$0xff] 0.0
      %35 = vst [vmem:[#allocation2 + $0x10] sm:$0xff] 0.0
      %36 = vst [vmem:[#allocation2 + $0x18] sm:$0xff] 0.0
    $region21: #{clothnet_forward.1} parent=1 // pred_fallthru
      _
    %v37 = vld [vmem:[#allocation2] sm:$0xff]
    %v38 = vld [vmem:[#allocation2 + $0x8] sm:$0xff]
    %v39 = vld [vmem:[#allocation2 + $0x10] sm:$0xff]
    %v40 = vld [vmem:[#allocation2 + $0x18] sm:$0xff]
    %v41 = vld [vmem:[%s0] sm:$0xff]
    %v42 = vld [vmem:[%s0 + $0x8] sm:$0xff]
    %v43 = vld [vmem:[%s0 + $0x10] sm:$0xff]
    %v44 = vld [vmem:[%s0 + $0x18] sm:$0xff]
    %v45 = vld [vmem:[%s0 + $0x20] sm:$0xff]
    %v46 = vld [vmem:[%s0 + $0x28] sm:$0xff]
    %v47 = vld [vmem:[%s0 + $0x30] sm:$0xff]
    %v48 = vld [vmem:[%s0 + $0x38] sm:$0xff]
    %v49 = vld [vmem:[%s0 + $0x40] sm:$0xff]
    %v50 = vld [vmem:[%s0 + $0x48] sm:$0xff]
    %v51 = vld [vmem:[%s0 + $0x50] sm:$0xff]
    %v52 = vld [vmem:[%s0 + $0x58] sm:$0xff]
    %v53 = vld [vmem:[%s0 + $0x60] sm:$0xff]
    %v54 = vld [vmem:[%s0 + $0x68] sm:$0xff]
    %v55 = vld [vmem:[%s0 + $0x70] sm:$0xff]
    %v56 = vld [vmem:[%s0 + $0x78] sm:$0xff]
    %v57 = vld [vmem:[%s0 + $0x80] sm:$0xff]
    %v58 = vld [vmem:[%s0 + $0x88] sm:$0xff]
    %v59 = vld [vmem:[%s0 + $0x90] sm:$0xff]
    %v60 = vld [vmem:[%s0 + $0x98] sm:$0xff]
    %v61 = vld [vmem:[%s0 + $0xa0] sm:$0xff]
    %v62 = vld [vmem:[%s0 + $0xa8] sm:$0xff]
    %v63 = vld [vmem:[%s0 + $0xb0] sm:$0xff]
    %v64 = vld [vmem:[%s0 + $0xb8] sm:$0xff]
    %v65 = vld [vmem:[%s0 + $0xc0] sm:$0xff]
    %v66 = vld [vmem:[%s0 + $0xc8] sm:$0xff]
    %v67 = vld [vmem:[%s0 + $0xd0] sm:$0xff]
    %v68 = vld [vmem:[%s0 + $0xd8] sm:$0xff]
    %v69 = vld [vmem:[%s0 + $0xe0] sm:$0xff]
    %v70 = vld [vmem:[%s0 + $0xe8] sm:$0xff]
    %v71 = vld [vmem:[%s0 + $0xf0] sm:$0xff]
    %v72 = vld [vmem:[%s0 + $0xf8] sm:$0xff]
    %v73 = vunpack.c.l.bf16 %v41
    %v74 = vunpack.c.h.bf16 %v41
    %v75 = vunpack.c.l.bf16 %v42
    %v76 = vunpack.c.h.bf16 %v42
    %v77 = vunpack.c.l.bf16 %v43
    %v78 = vunpack.c.h.bf16 %v43
    %v79 = vunpack.c.l.bf16 %v44
    %v80 = vunpack.c.h.bf16 %v44
    %v81 = vunpack.c.l.bf16 %v45
    %v82 = vunpack.c.h.bf16 %v45
    %v83 = vunpack.c.l.bf16 %v46
    %v84 = vunpack.c.h.bf16 %v46
    %v85 = vunpack.c.l.bf16 %v47
    %v86 = vunpack.c.h.bf16 %v47
    %v87 = vunpack.c.l.bf16 %v48
    %v88 = vunpack.c.h.bf16 %v48
    %v89 = vunpack.c.l.bf16 %v49
    %v90 = vunpack.c.h.bf16 %v49
    %v91 = vunpack.c.l.bf16 %v50
    %v92 = vunpack.c.h.bf16 %v50
    %v93 = vunpack.c.l.bf16 %v51
    %v94 = vunpack.c.h.bf16 %v51
    %v95 = vunpack.c.l.bf16 %v52
    %v96 = vunpack.c.h.bf16 %v52
    %v97 = vunpack.c.l.bf16 %v53
    %v98 = vunpack.c.h.bf16 %v53
    %v99 = vunpack.c.l.bf16 %v54
    %v100 = vunpack.c.h.bf16 %v54
    %v101 = vunpack.c.l.bf16 %v55
    %v102 = vunpack.c.h.bf16 %v55
    %v103 = vunpack.c.l.bf16 %v56
    %v104 = vunpack.c.h.bf16 %v56
    %v105 = vunpack.c.l.bf16 %v57
    %v106 = vunpack.c.h.bf16 %v57
    %v107 = vunpack.c.l.bf16 %v58
    %v108 = vunpack.c.h.bf16 %v58
    %v109 = vunpack.c.l.bf16 %v59
    %v110 = vunpack.c.h.bf16 %v59
    %v111 = vunpack.c.l.bf16 %v60
    %v112 = vunpack.c.h.bf16 %v60
    %v113 = vunpack.c.l.bf16 %v61
    %v114 = vunpack.c.h.bf16 %v61
    %v115 = vunpack.c.l.bf16 %v62
    %v116 = vunpack.c.h.bf16 %v62
    %v117 = vunpack.c.l.bf16 %v63
    %v118 = vunpack.c.h.bf16 %v63
    %v119 = vunpack.c.l.bf16 %v64
    %v120 = vunpack.c.h.bf16 %v64
    %v121 = vunpack.c.l.bf16 %v65
    %v122 = vunpack.c.h.bf16 %v65
    %v123 = vunpack.c.l.bf16 %v66
    %v124 = vunpack.c.h.bf16 %v66
    %v125 = vunpack.c.l.bf16 %v67
    %v126 = vunpack.c.h.bf16 %v67
    %v127 = vunpack.c.l.bf16 %v68
    %v128 = vunpack.c.h.bf16 %v68
    %v129 = vunpack.c.l.bf16 %v69
    %v130 = vunpack.c.h.bf16 %v69
    %v131 = vunpack.c.l.bf16 %v70
    %v132 = vunpack.c.h.bf16 %v70
    %v133 = vunpack.c.l.bf16 %v71
    %v134 = vunpack.c.h.bf16 %v71
    %v135 = vunpack.c.l.bf16 %v72
    %v136 = vunpack.c.h.bf16 %v72
    %v137 = vadd.f32 %v73, %v89
    %v138 = vrot.slane %v137, 4
    %v139 = vadd.f32 %v137, %v138
    %v140 = vrot.slane %v139, 2
    %v141 = vadd.f32 %v139, %v140
    %v142 = vrot.slane %v141, 1
    %v143 = vadd.f32 %v141, %v142
    %v144 = vadd.f32 %v74, %v90
    %v145 = vrot.slane %v144, 4
    %v146 = vadd.f32 %v144, %v145
    %v147 = vrot.slane %v146, 2
    %v148 = vadd.f32 %v146, %v147
    %v149 = vrot.slane %v148, 1
    %v150 = vadd.f32 %v148, %v149
    %v151 = vadd.f32 %v75, %v91
    %v152 = vrot.slane %v151, 4
    %v153 = vadd.f32 %v151, %v152
    %v154 = vrot.slane %v153, 2
    %v155 = vadd.f32 %v153, %v154
    %v156 = vrot.slane %v155, 1
    %v157 = vadd.f32 %v155, %v156
    %v158 = vadd.f32 %v76, %v92
    %v159 = vrot.slane %v158, 4
    %v160 = vadd.f32 %v158, %v159
    %v161 = vrot.slane %v160, 2
    %v162 = vadd.f32 %v160, %v161
    %v163 = vrot.slane %v162, 1
    %v164 = vadd.f32 %v162, %v163
    %v165 = vadd.f32 %v77, %v93
    %v166 = vrot.slane %v165, 4
    %v167 = vadd.f32 %v165, %v166
    %v168 = vrot.slane %v167, 2
    %v169 = vadd.f32 %v167, %v168
    %v170 = vrot.slane %v169, 1
    %v171 = vadd.f32 %v169, %v170
    %v172 = vadd.f32 %v78, %v94
    %v173 = vrot.slane %v172, 4
    %v174 = vadd.f32 %v172, %v173
    %v175 = vrot.slane %v174, 2
    %v176 = vadd.f32 %v174, %v175
    %v177 = vrot.slane %v176, 1
    %v178 = vadd.f32 %v176, %v177
    %v179 = vadd.f32 %v79, %v95
    %v180 = vrot.slane %v179, 4
    %v181 = vadd.f32 %v179, %v180
    %v182 = vrot.slane %v181, 2
    %v183 = vadd.f32 %v181, %v182
    %v184 = vrot.slane %v183, 1
    %v185 = vadd.f32 %v183, %v184
    %v186 = vadd.f32 %v80, %v96
    %v187 = vrot.slane %v186, 4
    %v188 = vadd.f32 %v186, %v187
    %v189 = vrot.slane %v188, 2
    %v190 = vadd.f32 %v188, %v189
    %v191 = vrot.slane %v190, 1
    %v192 = vadd.f32 %v190, %v191
    %v193 = vadd.f32 %v81, %v97
    %v194 = vrot.slane %v193, 4
    %v195 = vadd.f32 %v193, %v194
    %v196 = vrot.slane %v195, 2
    %v197 = vadd.f32 %v195, %v196
    %v198 = vrot.slane %v197, 1
    %v199 = vadd.f32 %v197, %v198
    %v200 = vadd.f32 %v82, %v98
    %v201 = vrot.slane %v200, 4
    %v202 = vadd.f32 %v200, %v201
    %v203 = vrot.slane %v202, 2
    %v204 = vadd.f32 %v202, %v203
    %v205 = vrot.slane %v204, 1
    %v206 = vadd.f32 %v204, %v205
    %v207 = vadd.f32 %v83, %v99
    %v208 = vrot.slane %v207, 4
    %v209 = vadd.f32 %v207, %v208
    %v210 = vrot.slane %v209, 2
    %v211 = vadd.f32 %v209, %v210
    %v212 = vrot.slane %v211, 1
    %v213 = vadd.f32 %v211, %v212
    %v214 = vadd.f32 %v84, %v100
    %v215 = vrot.slane %v214, 4
    %v216 = vadd.f32 %v214, %v215
    %v217 = vrot.slane %v216, 2
    %v218 = vadd.f32 %v216, %v217
    %v219 = vrot.slane %v218, 1
    %v220 = vadd.f32 %v218, %v219
    %v221 = vadd.f32 %v85, %v101
    %v222 = vrot.slane %v221, 4
    %v223 = vadd.f32 %v221, %v222
    %v224 = vrot.slane %v223, 2
    %v225 = vadd.f32 %v223, %v224
    %v226 = vrot.slane %v225, 1
    %v227 = vadd.f32 %v225, %v226
    %v228 = vadd.f32 %v86, %v102
    %v229 = vrot.slane %v228, 4
    %v230 = vadd.f32 %v228, %v229
    %v231 = vrot.slane %v230, 2
    %v232 = vadd.f32 %v230, %v231
    %v233 = vrot.slane %v232, 1
    %v234 = vadd.f32 %v232, %v233
    %v235 = vadd.f32 %v87, %v103
    %v236 = vrot.slane %v235, 4
    %v237 = vadd.f32 %v235, %v236
    %v238 = vrot.slane %v237, 2
    %v239 = vadd.f32 %v237, %v238
    %v240 = vrot.slane %v239, 1
    %v241 = vadd.f32 %v239, %v240
    %v242 = vadd.f32 %v88, %v104
    %v243 = vrot.slane %v242, 4
    %v244 = vadd.f32 %v242, %v243
    %v245 = vrot.slane %v244, 2
    %v246 = vadd.f32 %v244, %v245
    %v247 = vrot.slane %v246, 1
    %v248 = vadd.f32 %v246, %v247
    %v249 = vadd.f32 %v105, %v121
    %v250 = vrot.slane %v249, 4
    %v251 = vadd.f32 %v249, %v250
    %v252 = vrot.slane %v251, 2
    %v253 = vadd.f32 %v251, %v252
    %v254 = vrot.slane %v253, 1
    %v255 = vadd.f32 %v253, %v254
    %v256 = vadd.f32 %v106, %v122
    %v257 = vrot.slane %v256, 4
    %v258 = vadd.f32 %v256, %v257
    %v259 = vrot.slane %v258, 2
    %v260 = vadd.f32 %v258, %v259
    %v261 = vrot.slane %v260, 1
    %v262 = vadd.f32 %v260, %v261
    %v263 = vadd.f32 %v107, %v123
    %v264 = vrot.slane %v263, 4
    %v265 = vadd.f32 %v263, %v264
    %v266 = vrot.slane %v265, 2
    %v267 = vadd.f32 %v265, %v266
    %v268 = vrot.slane %v267, 1
    %v269 = vadd.f32 %v267, %v268
    %v270 = vadd.f32 %v108, %v124
    %v271 = vrot.slane %v270, 4
    %v272 = vadd.f32 %v270, %v271
    %v273 = vrot.slane %v272, 2
    %v274 = vadd.f32 %v272, %v273
    %v275 = vrot.slane %v274, 1
    %v276 = vadd.f32 %v274, %v275
    %v277 = vadd.f32 %v109, %v125
    %v278 = vrot.slane %v277, 4
    %v279 = vadd.f32 %v277, %v278
    %v280 = vrot.slane %v279, 2
    %v281 = vadd.f32 %v279, %v280
    %v282 = vrot.slane %v281, 1
    %v283 = vadd.f32 %v281, %v282
    %v284 = vadd.f32 %v110, %v126
    %v285 = vrot.slane %v284, 4
    %v286 = vadd.f32 %v284, %v285
    %v287 = vrot.slane %v286, 2
    %v288 = vadd.f32 %v286, %v287
    %v289 = vrot.slane %v288, 1
    %v290 = vadd.f32 %v288, %v289
    %v291 = vadd.f32 %v111, %v127
    %v292 = vrot.slane %v291, 4
    %v293 = vadd.f32 %v291, %v292
    %v294 = vrot.slane %v293, 2
    %v295 = vadd.f32 %v293, %v294
    %v296 = vrot.slane %v295, 1
    %v297 = vadd.f32 %v295, %v296
    %v298 = vadd.f32 %v112, %v128
    %v299 = vrot.slane %v298, 4
    %v300 = vadd.f32 %v298, %v299
    %v301 = vrot.slane %v300, 2
    %v302 = vadd.f32 %v300, %v301
    %v303 = vrot.slane %v302, 1
    %v304 = vadd.f32 %v302, %v303
    %v305 = vadd.f32 %v113, %v129
    %v306 = vrot.slane %v305, 4
    %v307 = vadd.f32 %v305, %v306
    %v308 = vrot.slane %v307, 2
    %v309 = vadd.f32 %v307, %v308
    %v310 = vrot.slane %v309, 1
    %v311 = vadd.f32 %v309, %v310
    %v312 = vadd.f32 %v114, %v130
    %v313 = vrot.slane %v312, 4
    %v314 = vadd.f32 %v312, %v313
    %v315 = vrot.slane %v314, 2
    %v316 = vadd.f32 %v314, %v315
    %v317 = vrot.slane %v316, 1
    %v318 = vadd.f32 %v316, %v317
    %v319 = vadd.f32 %v115, %v131
    %v320 = vrot.slane %v319, 4
    %v321 = vadd.f32 %v319, %v320
    %v322 = vrot.slane %v321, 2
    %v323 = vadd.f32 %v321, %v322
    %v324 = vrot.slane %v323, 1
    %v325 = vadd.f32 %v323, %v324
    %v326 = vadd.f32 %v116, %v132
    %v327 = vrot.slane %v326, 4
    %v328 = vadd.f32 %v326, %v327
    %v329 = vrot.slane %v328, 2
    %v330 = vadd.f32 %v328, %v329
    %v331 = vrot.slane %v330, 1
    %v332 = vadd.f32 %v330, %v331
    %v333 = vadd.f32 %v117, %v133
    %v334 = vrot.slane %v333, 4
    %v335 = vadd.f32 %v333, %v334
    %v336 = vrot.slane %v335, 2
    %v337 = vadd.f32 %v335, %v336
    %v338 = vrot.slane %v337, 1
    %v339 = vadd.f32 %v337, %v338
    %v340 = vadd.f32 %v118, %v134
    %v341 = vrot.slane %v340, 4
    %v342 = vadd.f32 %v340, %v341
    %v343 = vrot.slane %v342, 2
    %v344 = vadd.f32 %v342, %v343
    %v345 = vrot.slane %v344, 1
    %v346 = vadd.f32 %v344, %v345
    %v347 = vadd.f32 %v119, %v135
    %v348 = vrot.slane %v347, 4
    %v349 = vadd.f32 %v347, %v348
    %v350 = vrot.slane %v349, 2
    %v351 = vadd.f32 %v349, %v350
    %v352 = vrot.slane %v351, 1
    %v353 = vadd.f32 %v351, %v352
    %v354 = vadd.f32 %v120, %v136
    %v355 = vrot.slane %v354, 4
    %v356 = vadd.f32 %v354, %v355
    %v357 = vrot.slane %v356, 2
    %v358 = vadd.f32 %v356, %v357
    %v359 = vrot.slane %v358, 1
    %v360 = vadd.f32 %v358, %v359
    %v393 = vcombine.low %v143, %v150
    %v394 = vcombine.low %v157, %v164
    %v396 = vunpack.c.l.s4 1983009808
    %v397 = vunpack.c.0.s8 %v396
    %v398 = vlaneseq
    %v399 = vshrl.u32 %v398, 7
    %v400 = vsub.s32 %v397, %v399
    %v401 = vrot.slane %v393, %v400
    %v403 = vunpack.c.l.s4 1983009808
    %v404 = vunpack.c.0.s8 %v403
    %v405 = vlaneseq
    %v406 = vshrl.u32 %v405, 7
    %v407 = vsub.s32 %v404, %v406
    %v408 = vrot.slane %v394, %v407
    %v409 = vcombine.low %v401, %v408
    %v410 = vcombine.low %v171, %v178
    %v411 = vcombine.low %v185, %v192
    %v413 = vunpack.c.l.s4 1983009808
    %v414 = vunpack.c.0.s8 %v413
    %v415 = vlaneseq
    %v416 = vshrl.u32 %v415, 7
    %v417 = vsub.s32 %v414, %v416
    %v418 = vrot.slane %v410, %v417
    %v420 = vunpack.c.l.s4 1983009808
    %v421 = vunpack.c.0.s8 %v420
    %v422 = vlaneseq
    %v423 = vshrl.u32 %v422, 7
    %v424 = vsub.s32 %v421, %v423
    %v425 = vrot.slane %v411, %v424
    %v426 = vcombine.low %v418, %v425
    %v427 = vcombine.low %v199, %v206
    %v428 = vcombine.low %v213, %v220
    %v430 = vunpack.c.l.s4 1983009808
    %v431 = vunpack.c.0.s8 %v430
    %v432 = vlaneseq
    %v433 = vshrl.u32 %v432, 7
    %v434 = vsub.s32 %v431, %v433
    %v435 = vrot.slane %v427, %v434
    %v437 = vunpack.c.l.s4 1983009808
    %v438 = vunpack.c.0.s8 %v437
    %v439 = vlaneseq
    %v440 = vshrl.u32 %v439, 7
    %v441 = vsub.s32 %v438, %v440
    %v442 = vrot.slane %v428, %v441
    %v443 = vcombine.low %v435, %v442
    %v444 = vcombine.low %v227, %v234
    %v445 = vcombine.low %v241, %v248
    %v447 = vunpack.c.l.s4 1983009808
    %v448 = vunpack.c.0.s8 %v447
    %v449 = vlaneseq
    %v450 = vshrl.u32 %v449, 7
    %v451 = vsub.s32 %v448, %v450
    %v452 = vrot.slane %v444, %v451
    %v454 = vunpack.c.l.s4 1983009808
    %v455 = vunpack.c.0.s8 %v454
    %v456 = vlaneseq
    %v457 = vshrl.u32 %v456, 7
    %v458 = vsub.s32 %v455, %v457
    %v459 = vrot.slane %v445, %v458
    %v460 = vcombine.low %v452, %v459
    %v461 = vcombine.low %v255, %v262
    %v462 = vcombine.low %v269, %v276
    %v464 = vunpack.c.l.s4 1983009808
    %v465 = vunpack.c.0.s8 %v464
    %v466 = vlaneseq
    %v467 = vshrl.u32 %v466, 7
    %v468 = vsub.s32 %v465, %v467
    %v469 = vrot.slane %v461, %v468
    %v471 = vunpack.c.l.s4 1983009808
    %v472 = vunpack.c.0.s8 %v471
    %v473 = vlaneseq
    %v474 = vshrl.u32 %v473, 7
    %v475 = vsub.s32 %v472, %v474
    %v476 = vrot.slane %v462, %v475
    %v477 = vcombine.low %v469, %v476
    %v478 = vcombine.low %v283, %v290
    %v479 = vcombine.low %v297, %v304
    %v481 = vunpack.c.l.s4 1983009808
    %v482 = vunpack.c.0.s8 %v481
    %v483 = vlaneseq
    %v484 = vshrl.u32 %v483, 7
    %v485 = vsub.s32 %v482, %v484
    %v486 = vrot.slane %v478, %v485
    %v488 = vunpack.c.l.s4 1983009808
    %v489 = vunpack.c.0.s8 %v488
    %v490 = vlaneseq
    %v491 = vshrl.u32 %v490, 7
    %v492 = vsub.s32 %v489, %v491
    %v493 = vrot.slane %v479, %v492
    %v494 = vcombine.low %v486, %v493
    %v495 = vcombine.low %v311, %v318
    %v496 = vcombine.low %v325, %v332
    %v498 = vunpack.c.l.s4 1983009808
    %v499 = vunpack.c.0.s8 %v498
    %v500 = vlaneseq
    %v501 = vshrl.u32 %v500, 7
    %v502 = vsub.s32 %v499, %v501
    %v503 = vrot.slane %v495, %v502
    %v505 = vunpack.c.l.s4 1983009808
    %v506 = vunpack.c.0.s8 %v505
    %v507 = vlaneseq
    %v508 = vshrl.u32 %v507, 7
    %v509 = vsub.s32 %v506, %v508
    %v510 = vrot.slane %v496, %v509
    %v511 = vcombine.low %v503, %v510
    %v512 = vcombine.low %v339, %v346
    %v513 = vcombine.low %v353, %v360
    %v515 = vunpack.c.l.s4 1983009808
    %v516 = vunpack.c.0.s8 %v515
    %v517 = vlaneseq
    %v518 = vshrl.u32 %v517, 7
    %v519 = vsub.s32 %v516, %v518
    %v520 = vrot.slane %v512, %v519
    %v522 = vunpack.c.l.s4 1983009808
    %v523 = vunpack.c.0.s8 %v522
    %v524 = vlaneseq
    %v525 = vshrl.u32 %v524, 7
    %v526 = vsub.s32 %v523, %v525
    %v527 = vrot.slane %v513, %v526
    %v528 = vcombine.low %v520, %v527
    %vm529 = vcmask 1044484
    %v530 = vsel %vm529, %v409, %v409
    %vm531 = vcmask 1046534
    %v532 = vsel %vm531, %v409, %v530
    %v533 = vrot.slane %v477, 7
    %vm534 = vcmask 1041409
    %v535 = vsel %vm534, %v533, %v532
    %vm536 = vcmask 1043459
    %v537 = vsel %vm536, %v533, %v535
    %vm538 = vcmask 1045509
    %v539 = vsel %vm538, %v533, %v537
    %vm540 = vcmask 1047559
    %v541 = vsel %vm540, %v533, %v539
    %v542 = vsel %vm529, %v426, %v426
    %v543 = vsel %vm531, %v426, %v542
    %v544 = vrot.slane %v494, 7
    %v545 = vsel %vm534, %v544, %v543
    %v546 = vsel %vm536, %v544, %v545
    %v547 = vsel %vm538, %v544, %v546
    %v548 = vsel %vm540, %v544, %v547
    %v549 = vsel %vm529, %v443, %v443
    %v550 = vsel %vm531, %v443, %v549
    %v551 = vrot.slane %v511, 7
    %v552 = vsel %vm534, %v551, %v550
    %v553 = vsel %vm536, %v551, %v552
    %v554 = vsel %vm538, %v551, %v553
    %v555 = vsel %vm540, %v551, %v554
    %v556 = vsel %vm529, %v460, %v460
    %v557 = vsel %vm531, %v460, %v556
    %v558 = vrot.slane %v528, 7
    %v559 = vsel %vm534, %v558, %v557
    %v560 = vsel %vm536, %v558, %v559
    %v561 = vsel %vm538, %v558, %v560
    %v562 = vsel %vm540, %v558, %v561
    %v567 = vadd.f32 %v37, %v541
    %v568 = vadd.f32 %v38, %v548
    %v569 = vadd.f32 %v39, %v555
    %v570 = vadd.f32 %v40, %v562
    %571 = vst [vmem:[#allocation2] sm:$0xff] %v567
    %572 = vst [vmem:[#allocation2 + $0x8] sm:$0xff] %v568
    %573 = vst [vmem:[#allocation2 + $0x10] sm:$0xff] %v569
    %574 = vst [vmem:[#allocation2 + $0x18] sm:$0xff] %v570
    // Predicated region
    $region22: #{clothnet_forward.1} parent=1 // pred_check
      %p575 = pneg %p29
    $region23: #{clothnet_forward.1} parent=1 // pred_check_branch
      %577 = sbr.rel (%p575) target = $region25
    $region24: #{clothnet_forward.1} parent=1 // pred_region
      %v578 = vld [vmem:[#allocation2] sm:$0xff]
      %v579 = vld [vmem:[#allocation2 + $0x8] sm:$0xff]
      %v580 = vld [vmem:[#allocation2 + $0x10] sm:$0xff]
      %v581 = vld [vmem:[#allocation2 + $0x18] sm:$0xff]
      %v586 = vcombine.high %v578, %v578
      %v588 = vunpack.c.l.s4 1983009808
      %v589 = vunpack.c.0.s8 %v588
      %v590 = vlaneseq
      %v591 = vshrl.u32 %v590, 7
      %v592 = vsub.s32 %v589, %v591
      %v593 = vrot.slane %v578, %v592
      %v595 = vunpack.c.l.s4 1983009808
      %v596 = vunpack.c.0.s8 %v595
      %v597 = vlaneseq
      %v598 = vshrl.u32 %v597, 7
      %v599 = vsub.s32 %v596, %v598
      %v600 = vrot.slane %v586, %v599
      %v601 = vcombine.high %v593, %v593
      %v602 = vcombine.high %v600, %v600
      %v603 = vcombine.high %v579, %v579
      %v605 = vunpack.c.l.s4 1983009808
      %v606 = vunpack.c.0.s8 %v605
      %v607 = vlaneseq
      %v608 = vshrl.u32 %v607, 7
      %v609 = vsub.s32 %v606, %v608
      %v610 = vrot.slane %v579, %v609
      %v612 = vunpack.c.l.s4 1983009808
      %v613 = vunpack.c.0.s8 %v612
      %v614 = vlaneseq
      %v615 = vshrl.u32 %v614, 7
      %v616 = vsub.s32 %v613, %v615
      %v617 = vrot.slane %v603, %v616
      %v618 = vcombine.high %v610, %v610
      %v619 = vcombine.high %v617, %v617
      %v620 = vcombine.high %v580, %v580
      %v622 = vunpack.c.l.s4 1983009808
      %v623 = vunpack.c.0.s8 %v622
      %v624 = vlaneseq
      %v625 = vshrl.u32 %v624, 7
      %v626 = vsub.s32 %v623, %v625
      %v627 = vrot.slane %v580, %v626
      %v629 = vunpack.c.l.s4 1983009808
      %v630 = vunpack.c.0.s8 %v629
      %v631 = vlaneseq
      %v632 = vshrl.u32 %v631, 7
      %v633 = vsub.s32 %v630, %v632
      %v634 = vrot.slane %v620, %v633
      %v635 = vcombine.high %v627, %v627
      %v636 = vcombine.high %v634, %v634
      %v637 = vcombine.high %v581, %v581
      %v639 = vunpack.c.l.s4 1983009808
      %v640 = vunpack.c.0.s8 %v639
      %v641 = vlaneseq
      %v642 = vshrl.u32 %v641, 7
      %v643 = vsub.s32 %v640, %v642
      %v644 = vrot.slane %v581, %v643
      %v646 = vunpack.c.l.s4 1983009808
      %v647 = vunpack.c.0.s8 %v646
      %v648 = vlaneseq
      %v649 = vshrl.u32 %v648, 7
      %v650 = vsub.s32 %v647, %v649
      %v651 = vrot.slane %v637, %v650
      %v652 = vcombine.high %v644, %v644
      %v653 = vcombine.high %v651, %v651
      %v670 = vpack.c.bf16 %v593, %v593
      %v671 = vpack.c.bf16 %v601, %v601
      %v672 = vpack.c.bf16 %v600, %v600
      %v673 = vpack.c.bf16 %v602, %v602
      %v674 = vpack.c.bf16 %v610, %v610
      %v675 = vpack.c.bf16 %v618, %v618
      %v676 = vpack.c.bf16 %v617, %v617
      %v677 = vpack.c.bf16 %v619, %v619
      %v678 = vpack.c.bf16 %v627, %v627
      %v679 = vpack.c.bf16 %v635, %v635
      %v680 = vpack.c.bf16 %v634, %v634
      %v681 = vpack.c.bf16 %v636, %v636
      %v682 = vpack.c.bf16 %v644, %v644
      %v683 = vpack.c.bf16 %v652, %v652
      %v684 = vpack.c.bf16 %v651, %v651
      %v685 = vpack.c.bf16 %v653, %v653
      %v686 = vld [vmem:[#allocation3] sm:$0xf]
      %v687 = vld [vmem:[#allocation3 + $0x4] sm:$0xf]
      %v688 = vld [vmem:[#allocation3 + $0x8] sm:$0xf]
      %v689 = vld [vmem:[#allocation3 + $0xc] sm:$0xf]
      %v690 = vld [vmem:[#allocation3 + $0x10] sm:$0xf]
      %v691 = vld [vmem:[#allocation3 + $0x14] sm:$0xf]
      %v692 = vld [vmem:[#allocation3 + $0x18] sm:$0xf]
      %v693 = vld [vmem:[#allocation3 + $0x1c] sm:$0xf]
      %v694 = vld [vmem:[#allocation3 + $0x20] sm:$0xf]
      %v695 = vld [vmem:[#allocation3 + $0x24] sm:$0xf]
      %v696 = vld [vmem:[#allocation3 + $0x28] sm:$0xf]
      %v697 = vld [vmem:[#allocation3 + $0x2c] sm:$0xf]
      %v698 = vld [vmem:[#allocation3 + $0x30] sm:$0xf]
      %v699 = vld [vmem:[#allocation3 + $0x34] sm:$0xf]
      %v700 = vld [vmem:[#allocation3 + $0x38] sm:$0xf]
      %v701 = vld [vmem:[#allocation3 + $0x3c] sm:$0xf]
      %v702 = vld [vmem:[#allocation3 + $0x40] sm:$0xf]
      %v703 = vld [vmem:[#allocation3 + $0x44] sm:$0xf]
      %v704 = vld [vmem:[#allocation3 + $0x48] sm:$0xf]
      %v705 = vld [vmem:[#allocation3 + $0x4c] sm:$0xf]
      %v706 = vld [vmem:[#allocation3 + $0x50] sm:$0xf]
      %v707 = vld [vmem:[#allocation3 + $0x54] sm:$0xf]
      %v708 = vld [vmem:[#allocation3 + $0x58] sm:$0xf]
      %v709 = vld [vmem:[#allocation3 + $0x5c] sm:$0xf]
      %v710 = vld [vmem:[#allocation3 + $0x60] sm:$0xf]
      %v711 = vld [vmem:[#allocation3 + $0x64] sm:$0xf]
      %v712 = vld [vmem:[#allocation3 + $0x68] sm:$0xf]
      %v713 = vld [vmem:[#allocation3 + $0x6c] sm:$0xf]
      %v714 = vld [vmem:[#allocation3 + $0x70] sm:$0xf]
      %v715 = vld [vmem:[#allocation3 + $0x74] sm:$0xf]
      %v716 = vld [vmem:[#allocation3 + $0x78] sm:$0xf]
      %v717 = vld [vmem:[#allocation3 + $0x7c] sm:$0xf]
      %v718 = vld [vmem:[#allocation3 + $0x80] sm:$0xf]
      %v719 = vld [vmem:[#allocation3 + $0x84] sm:$0xf]
      %v720 = vld [vmem:[#allocation3 + $0x88] sm:$0xf]
      %v721 = vld [vmem:[#allocation3 + $0x8c] sm:$0xf]
      %v722 = vld [vmem:[#allocation3 + $0x90] sm:$0xf]
      %v723 = vld [vmem:[#allocation3 + $0x94] sm:$0xf]
      %v724 = vld [vmem:[#allocation3 + $0x98] sm:$0xf]
      %v725 = vld [vmem:[#allocation3 + $0x9c] sm:$0xf]
      %v726 = vld [vmem:[#allocation3 + $0xa0] sm:$0xf]
      %v727 = vld [vmem:[#allocation3 + $0xa4] sm:$0xf]
      %v728 = vld [vmem:[#allocation3 + $0xa8] sm:$0xf]
      %v729 = vld [vmem:[#allocation3 + $0xac] sm:$0xf]
      %v730 = vld [vmem:[#allocation3 + $0xb0] sm:$0xf]
      %v731 = vld [vmem:[#allocation3 + $0xb4] sm:$0xf]
      %v732 = vld [vmem:[#allocation3 + $0xb8] sm:$0xf]
      %v733 = vld [vmem:[#allocation3 + $0xbc] sm:$0xf]
      %v734 = vld [vmem:[#allocation3 + $0xc0] sm:$0xf]
      %v735 = vld [vmem:[#allocation3 + $0xc4] sm:$0xf]
      %v736 = vld [vmem:[#allocation3 + $0xc8] sm:$0xf]
      %v737 = vld [vmem:[#allocation3 + $0xcc] sm:$0xf]
      %v738 = vld [vmem:[#allocation3 + $0xd0] sm:$0xf]
      %v739 = vld [vmem:[#allocation3 + $0xd4] sm:$0xf]
      %v740 = vld [vmem:[#allocation3 + $0xd8] sm:$0xf]
      %v741 = vld [vmem:[#allocation3 + $0xdc] sm:$0xf]
      %v742 = vld [vmem:[#allocation3 + $0xe0] sm:$0xf]
      %v743 = vld [vmem:[#allocation3 + $0xe4] sm:$0xf]
      %v744 = vld [vmem:[#allocation3 + $0xe8] sm:$0xf]
      %v745 = vld [vmem:[#allocation3 + $0xec] sm:$0xf]
      %v746 = vld [vmem:[#allocation3 + $0xf0] sm:$0xf]
      %v747 = vld [vmem:[#allocation3 + $0xf4] sm:$0xf]
      %v748 = vld [vmem:[#allocation3 + $0xf8] sm:$0xf]
      %v749 = vld [vmem:[#allocation3 + $0xfc] sm:$0xf]
      %v750 = vld [vmem:[#allocation3 + $0x100] sm:$0xf]
      %v751 = vld [vmem:[#allocation3 + $0x104] sm:$0xf]
      %v752 = vld [vmem:[#allocation3 + $0x108] sm:$0xf]
      %v753 = vld [vmem:[#allocation3 + $0x10c] sm:$0xf]
      %v754 = vld [vmem:[#allocation3 + $0x110] sm:$0xf]
      %v755 = vld [vmem:[#allocation3 + $0x114] sm:$0xf]
      %v756 = vld [vmem:[#allocation3 + $0x118] sm:$0xf]
      %v757 = vld [vmem:[#allocation3 + $0x11c] sm:$0xf]
      %v758 = vld [vmem:[#allocation3 + $0x120] sm:$0xf]
      %v759 = vld [vmem:[#allocation3 + $0x124] sm:$0xf]
      %v760 = vld [vmem:[#allocation3 + $0x128] sm:$0xf]
      %v761 = vld [vmem:[#allocation3 + $0x12c] sm:$0xf]
      %v762 = vld [vmem:[#allocation3 + $0x130] sm:$0xf]
      %v763 = vld [vmem:[#allocation3 + $0x134] sm:$0xf]
      %v764 = vld [vmem:[#allocation3 + $0x138] sm:$0xf]
      %v765 = vld [vmem:[#allocation3 + $0x13c] sm:$0xf]
      %v766 = vld [vmem:[#allocation3 + $0x140] sm:$0xf]
      %v767 = vld [vmem:[#allocation3 + $0x144] sm:$0xf]
      %v768 = vld [vmem:[#allocation3 + $0x148] sm:$0xf]
      %v769 = vld [vmem:[#allocation3 + $0x14c] sm:$0xf]
      %v770 = vld [vmem:[#allocation3 + $0x150] sm:$0xf]
      %v771 = vld [vmem:[#allocation3 + $0x154] sm:$0xf]
      %v772 = vld [vmem:[#allocation3 + $0x158] sm:$0xf]
      %v773 = vld [vmem:[#allocation3 + $0x15c] sm:$0xf]
      %v774 = vld [vmem:[#allocation3 + $0x160] sm:$0xf]
      %v775 = vld [vmem:[#allocation3 + $0x164] sm:$0xf]
      %v776 = vld [vmem:[#allocation3 + $0x168] sm:$0xf]
      %v777 = vld [vmem:[#allocation3 + $0x16c] sm:$0xf]
      %v778 = vld [vmem:[#allocation3 + $0x170] sm:$0xf]
      %v779 = vld [vmem:[#allocation3 + $0x174] sm:$0xf]
      %v780 = vld [vmem:[#allocation3 + $0x178] sm:$0xf]
      %v781 = vld [vmem:[#allocation3 + $0x17c] sm:$0xf]
      %v782 = vld [vmem:[#allocation3 + $0x180] sm:$0xf]
      %v783 = vld [vmem:[#allocation3 + $0x184] sm:$0xf]
      %v784 = vld [vmem:[#allocation3 + $0x188] sm:$0xf]
      %v785 = vld [vmem:[#allocation3 + $0x18c] sm:$0xf]
      %v786 = vld [vmem:[#allocation3 + $0x190] sm:$0xf]
      %v787 = vld [vmem:[#allocation3 + $0x194] sm:$0xf]
      %v788 = vld [vmem:[#allocation3 + $0x198] sm:$0xf]
      %v789 = vld [vmem:[#allocation3 + $0x19c] sm:$0xf]
      %v790 = vld [vmem:[#allocation3 + $0x1a0] sm:$0xf]
      %v791 = vld [vmem:[#allocation3 + $0x1a4] sm:$0xf]
      %v792 = vld [vmem:[#allocation3 + $0x1a8] sm:$0xf]
      %v793 = vld [vmem:[#allocation3 + $0x1ac] sm:$0xf]
      %v794 = vld [vmem:[#allocation3 + $0x1b0] sm:$0xf]
      %v795 = vld [vmem:[#allocation3 + $0x1b4] sm:$0xf]
      %v796 = vld [vmem:[#allocation3 + $0x1b8] sm:$0xf]
      %v797 = vld [vmem:[#allocation3 + $0x1bc] sm:$0xf]
      %v798 = vld [vmem:[#allocation3 + $0x1c0] sm:$0xf]
      %v799 = vld [vmem:[#allocation3 + $0x1c4] sm:$0xf]
      %v800 = vld [vmem:[#allocation3 + $0x1c8] sm:$0xf]
      %v801 = vld [vmem:[#allocation3 + $0x1cc] sm:$0xf]
      %v802 = vld [vmem:[#allocation3 + $0x1d0] sm:$0xf]
      %v803 = vld [vmem:[#allocation3 + $0x1d4] sm:$0xf]
      %v804 = vld [vmem:[#allocation3 + $0x1d8] sm:$0xf]
      %v805 = vld [vmem:[#allocation3 + $0x1dc] sm:$0xf]
      %v806 = vld [vmem:[#allocation3 + $0x1e0] sm:$0xf]
      %v807 = vld [vmem:[#allocation3 + $0x1e4] sm:$0xf]
      %v808 = vld [vmem:[#allocation3 + $0x1e8] sm:$0xf]
      %v809 = vld [vmem:[#allocation3 + $0x1ec] sm:$0xf]
      %v810 = vld [vmem:[#allocation3 + $0x1f0] sm:$0xf]
      %v811 = vld [vmem:[#allocation3 + $0x1f4] sm:$0xf]
      %v812 = vld [vmem:[#allocation3 + $0x1f8] sm:$0xf]
      %v813 = vld [vmem:[#allocation3 + $0x1fc] sm:$0xf]
      %v814 = vld [vmem:[#allocation3 + $0x200] sm:$0xf]
      %v815 = vld [vmem:[#allocation3 + $0x204] sm:$0xf]
      %v816 = vld [vmem:[#allocation3 + $0x208] sm:$0xf]
      %v817 = vld [vmem:[#allocation3 + $0x20c] sm:$0xf]
      %v818 = vld [vmem:[#allocation3 + $0x210] sm:$0xf]
      %v819 = vld [vmem:[#allocation3 + $0x214] sm:$0xf]
      %v820 = vld [vmem:[#allocation3 + $0x218] sm:$0xf]
      %v821 = vld [vmem:[#allocation3 + $0x21c] sm:$0xf]
      %v822 = vld [vmem:[#allocation3 + $0x220] sm:$0xf]
      %v823 = vld [vmem:[#allocation3 + $0x224] sm:$0xf]
      %v824 = vld [vmem:[#allocation3 + $0x228] sm:$0xf]
      %v825 = vld [vmem:[#allocation3 + $0x22c] sm:$0xf]
      %v826 = vld [vmem:[#allocation3 + $0x230] sm:$0xf]
      %v827 = vld [vmem:[#allocation3 + $0x234] sm:$0xf]
      %v828 = vld [vmem:[#allocation3 + $0x238] sm:$0xf]
      %v829 = vld [vmem:[#allocation3 + $0x23c] sm:$0xf]
      %v830 = vld [vmem:[#allocation3 + $0x240] sm:$0xf]
      %v831 = vld [vmem:[#allocation3 + $0x244] sm:$0xf]
      %v832 = vld [vmem:[#allocation3 + $0x248] sm:$0xf]
      %v833 = vld [vmem:[#allocation3 + $0x24c] sm:$0xf]
      %v834 = vld [vmem:[#allocation3 + $0x250] sm:$0xf]
      %v835 = vld [vmem:[#allocation3 + $0x254] sm:$0xf]
      %v836 = vld [vmem:[#allocation3 + $0x258] sm:$0xf]
      %v837 = vld [vmem:[#allocation3 + $0x25c] sm:$0xf]
      %v838 = vld [vmem:[#allocation3 + $0x260] sm:$0xf]
      %v839 = vld [vmem:[#allocation3 + $0x264] sm:$0xf]
      %v840 = vld [vmem:[#allocation3 + $0x268] sm:$0xf]
      %v841 = vld [vmem:[#allocation3 + $0x26c] sm:$0xf]
      %v842 = vld [vmem:[#allocation3 + $0x270] sm:$0xf]
      %v843 = vld [vmem:[#allocation3 + $0x274] sm:$0xf]
      %v844 = vld [vmem:[#allocation3 + $0x278] sm:$0xf]
      %v845 = vld [vmem:[#allocation3 + $0x27c] sm:$0xf]
      %v846 = vld [vmem:[#allocation3 + $0x280] sm:$0xf]
      %v847 = vld [vmem:[#allocation3 + $0x284] sm:$0xf]
      %v848 = vld [vmem:[#allocation3 + $0x288] sm:$0xf]
      %v849 = vld [vmem:[#allocation3 + $0x28c] sm:$0xf]
      %v850 = vld [vmem:[#allocation3 + $0x290] sm:$0xf]
      %v851 = vld [vmem:[#allocation3 + $0x294] sm:$0xf]
      %v852 = vld [vmem:[#allocation3 + $0x298] sm:$0xf]
      %v853 = vld [vmem:[#allocation3 + $0x29c] sm:$0xf]
      %v854 = vld [vmem:[#allocation3 + $0x2a0] sm:$0xf]
      %v855 = vld [vmem:[#allocation3 + $0x2a4] sm:$0xf]
      %v856 = vld [vmem:[#allocation3 + $0x2a8] sm:$0xf]
      %v857 = vld [vmem:[#allocation3 + $0x2ac] sm:$0xf]
      %v858 = vld [vmem:[#allocation3 + $0x2b0] sm:$0xf]
      %v859 = vld [vmem:[#allocation3 + $0x2b4] sm:$0xf]
      %v860 = vld [vmem:[#allocation3 + $0x2b8] sm:$0xf]
      %v861 = vld [vmem:[#allocation3 + $0x2bc] sm:$0xf]
      %v862 = vld [vmem:[#allocation3 + $0x2c0] sm:$0xf]
      %v863 = vld [vmem:[#allocation3 + $0x2c4] sm:$0xf]
      %v864 = vld [vmem:[#allocation3 + $0x2c8] sm:$0xf]
      %v865 = vld [vmem:[#allocation3 + $0x2cc] sm:$0xf]
      %v866 = vld [vmem:[#allocation3 + $0x2d0] sm:$0xf]
      %v867 = vld [vmem:[#allocation3 + $0x2d4] sm:$0xf]
      %v868 = vld [vmem:[#allocation3 + $0x2d8] sm:$0xf]
      %v869 = vld [vmem:[#allocation3 + $0x2dc] sm:$0xf]
      %v870 = vld [vmem:[#allocation3 + $0x2e0] sm:$0xf]
      %v871 = vld [vmem:[#allocation3 + $0x2e4] sm:$0xf]
      %v872 = vld [vmem:[#allocation3 + $0x2e8] sm:$0xf]
      %v873 = vld [vmem:[#allocation3 + $0x2ec] sm:$0xf]
      %v874 = vld [vmem:[#allocation3 + $0x2f0] sm:$0xf]
      %v875 = vld [vmem:[#allocation3 + $0x2f4] sm:$0xf]
      %v876 = vld [vmem:[#allocation3 + $0x2f8] sm:$0xf]
      %v877 = vld [vmem:[#allocation3 + $0x2fc] sm:$0xf]
      %v878 = vld [vmem:[#allocation3 + $0x300] sm:$0xf]
      %v879 = vld [vmem:[#allocation3 + $0x304] sm:$0xf]
      %v880 = vld [vmem:[#allocation3 + $0x308] sm:$0xf]
      %v881 = vld [vmem:[#allocation3 + $0x30c] sm:$0xf]
      %v882 = vld [vmem:[#allocation3 + $0x310] sm:$0xf]
      %v883 = vld [vmem:[#allocation3 + $0x314] sm:$0xf]
      %v884 = vld [vmem:[#allocation3 + $0x318] sm:$0xf]
      %v885 = vld [vmem:[#allocation3 + $0x31c] sm:$0xf]
      %v886 = vld [vmem:[#allocation3 + $0x320] sm:$0xf]
      %v887 = vld [vmem:[#allocation3 + $0x324] sm:$0xf]
      %v888 = vld [vmem:[#allocation3 + $0x328] sm:$0xf]
      %v889 = vld [vmem:[#allocation3 + $0x32c] sm:$0xf]
      %v890 = vld [vmem:[#allocation3 + $0x330] sm:$0xf]
      %v891 = vld [vmem:[#allocation3 + $0x334] sm:$0xf]
      %v892 = vld [vmem:[#allocation3 + $0x338] sm:$0xf]
      %v893 = vld [vmem:[#allocation3 + $0x33c] sm:$0xf]
      %v894 = vld [vmem:[#allocation3 + $0x340] sm:$0xf]
      %v895 = vld [vmem:[#allocation3 + $0x344] sm:$0xf]
      %v896 = vld [vmem:[#allocation3 + $0x348] sm:$0xf]
      %v897 = vld [vmem:[#allocation3 + $0x34c] sm:$0xf]
      %v898 = vld [vmem:[#allocation3 + $0x350] sm:$0xf]
      %v899 = vld [vmem:[#allocation3 + $0x354] sm:$0xf]
      %v900 = vld [vmem:[#allocation3 + $0x358] sm:$0xf]
      %v901 = vld [vmem:[#allocation3 + $0x35c] sm:$0xf]
      %v902 = vld [vmem:[#allocation3 + $0x360] sm:$0xf]
      %v903 = vld [vmem:[#allocation3 + $0x364] sm:$0xf]
      %v904 = vld [vmem:[#allocation3 + $0x368] sm:$0xf]
      %v905 = vld [vmem:[#allocation3 + $0x36c] sm:$0xf]
      %v906 = vld [vmem:[#allocation3 + $0x370] sm:$0xf]
      %v907 = vld [vmem:[#allocation3 + $0x374] sm:$0xf]
      %v908 = vld [vmem:[#allocation3 + $0x378] sm:$0xf]
      %v909 = vld [vmem:[#allocation3 + $0x37c] sm:$0xf]
      %v910 = vld [vmem:[#allocation3 + $0x380] sm:$0xf]
      %v911 = vld [vmem:[#allocation3 + $0x384] sm:$0xf]
      %v912 = vld [vmem:[#allocation3 + $0x388] sm:$0xf]
      %v913 = vld [vmem:[#allocation3 + $0x38c] sm:$0xf]
      %v914 = vld [vmem:[#allocation3 + $0x390] sm:$0xf]
      %v915 = vld [vmem:[#allocation3 + $0x394] sm:$0xf]
      %v916 = vld [vmem:[#allocation3 + $0x398] sm:$0xf]
      %v917 = vld [vmem:[#allocation3 + $0x39c] sm:$0xf]
      %v918 = vld [vmem:[#allocation3 + $0x3a0] sm:$0xf]
      %v919 = vld [vmem:[#allocation3 + $0x3a4] sm:$0xf]
      %v920 = vld [vmem:[#allocation3 + $0x3a8] sm:$0xf]
      %v921 = vld [vmem:[#allocation3 + $0x3ac] sm:$0xf]
      %v922 = vld [vmem:[#allocation3 + $0x3b0] sm:$0xf]
      %v923 = vld [vmem:[#allocation3 + $0x3b4] sm:$0xf]
      %v924 = vld [vmem:[#allocation3 + $0x3b8] sm:$0xf]
      %v925 = vld [vmem:[#allocation3 + $0x3bc] sm:$0xf]
      %v926 = vld [vmem:[#allocation3 + $0x3c0] sm:$0xf]
      %v927 = vld [vmem:[#allocation3 + $0x3c4] sm:$0xf]
      %v928 = vld [vmem:[#allocation3 + $0x3c8] sm:$0xf]
      %v929 = vld [vmem:[#allocation3 + $0x3cc] sm:$0xf]
      %v930 = vld [vmem:[#allocation3 + $0x3d0] sm:$0xf]
      %v931 = vld [vmem:[#allocation3 + $0x3d4] sm:$0xf]
      %v932 = vld [vmem:[#allocation3 + $0x3d8] sm:$0xf]
      %v933 = vld [vmem:[#allocation3 + $0x3dc] sm:$0xf]
      %v934 = vld [vmem:[#allocation3 + $0x3e0] sm:$0xf]
      %v935 = vld [vmem:[#allocation3 + $0x3e4] sm:$0xf]
      %v936 = vld [vmem:[#allocation3 + $0x3e8] sm:$0xf]
      %v937 = vld [vmem:[#allocation3 + $0x3ec] sm:$0xf]
      %v938 = vld [vmem:[#allocation3 + $0x3f0] sm:$0xf]
      %v939 = vld [vmem:[#allocation3 + $0x3f4] sm:$0xf]
      %v940 = vld [vmem:[#allocation3 + $0x3f8] sm:$0xf]
      %v941 = vld [vmem:[#allocation3 + $0x3fc] sm:$0xf]
      %v1198 = vunpack.c.l.b16 %v686
      %v1199 = vunpack.c.l.b16 %v687
      %v1200 = vunpack.c.l.b16 %v688
      %v1201 = vunpack.c.l.b16 %v689
      %v1202 = vunpack.c.l.b16 %v690
      %v1203 = vunpack.c.l.b16 %v691
      %v1204 = vunpack.c.l.b16 %v692
      %v1205 = vunpack.c.l.b16 %v693
      %v1206 = vunpack.c.l.b16 %v694
      %v1207 = vunpack.c.l.b16 %v695
      %v1208 = vunpack.c.l.b16 %v696
      %v1209 = vunpack.c.l.b16 %v697
      %v1210 = vunpack.c.l.b16 %v698
      %v1211 = vunpack.c.l.b16 %v699
      %v1212 = vunpack.c.l.b16 %v700
      %v1213 = vunpack.c.l.b16 %v701
      %v1214 = vunpack.c.l.b16 %v702
      %v1215 = vunpack.c.l.b16 %v703
      %v1216 = vunpack.c.l.b16 %v704
      %v1217 = vunpack.c.l.b16 %v705
      %v1218 = vunpack.c.l.b16 %v706
      %v1219 = vunpack.c.l.b16 %v707
      %v1220 = vunpack.c.l.b16 %v708
      %v1221 = vunpack.c.l.b16 %v709
      %v1222 = vunpack.c.l.b16 %v710
      %v1223 = vunpack.c.l.b16 %v711
      %v1224 = vunpack.c.l.b16 %v712
      %v1225 = vunpack.c.l.b16 %v713
      %v1226 = vunpack.c.l.b16 %v714
      %v1227 = vunpack.c.l.b16 %v715
      %v1228 = vunpack.c.l.b16 %v716
      %v1229 = vunpack.c.l.b16 %v717
      %v1230 = vunpack.c.l.b16 %v718
      %v1231 = vunpack.c.l.b16 %v719
      %v1232 = vunpack.c.l.b16 %v720
      %v1233 = vunpack.c.l.b16 %v721
      %v1234 = vunpack.c.l.b16 %v722
      %v1235 = vunpack.c.l.b16 %v723
      %v1236 = vunpack.c.l.b16 %v724
      %v1237 = vunpack.c.l.b16 %v725
      %v1238 = vunpack.c.l.b16 %v726
      %v1239 = vunpack.c.l.b16 %v727
      %v1240 = vunpack.c.l.b16 %v728
      %v1241 = vunpack.c.l.b16 %v729
      %v1242 = vunpack.c.l.b16 %v730
      %v1243 = vunpack.c.l.b16 %v731
      %v1244 = vunpack.c.l.b16 %v732
      %v1245 = vunpack.c.l.b16 %v733
      %v1246 = vunpack.c.l.b16 %v734
      %v1247 = vunpack.c.l.b16 %v735
      %v1248 = vunpack.c.l.b16 %v736
      %v1249 = vunpack.c.l.b16 %v737
      %v1250 = vunpack.c.l.b16 %v738
      %v1251 = vunpack.c.l.b16 %v739
      %v1252 = vunpack.c.l.b16 %v740
      %v1253 = vunpack.c.l.b16 %v741
      %v1254 = vunpack.c.l.b16 %v742
      %v1255 = vunpack.c.l.b16 %v743
      %v1256 = vunpack.c.l.b16 %v744
      %v1257 = vunpack.c.l.b16 %v745
      %v1258 = vunpack.c.l.b16 %v746
      %v1259 = vunpack.c.l.b16 %v747
      %v1260 = vunpack.c.l.b16 %v748
      %v1261 = vunpack.c.l.b16 %v749
      %v1262 = vunpack.c.l.b16 %v750
      %v1263 = vunpack.c.l.b16 %v751
      %v1264 = vunpack.c.l.b16 %v752
      %v1265 = vunpack.c.l.b16 %v753
      %v1266 = vunpack.c.l.b16 %v754
      %v1267 = vunpack.c.l.b16 %v755
      %v1268 = vunpack.c.l.b16 %v756
      %v1269 = vunpack.c.l.b16 %v757
      %v1270 = vunpack.c.l.b16 %v758
      %v1271 = vunpack.c.l.b16 %v759
      %v1272 = vunpack.c.l.b16 %v760
      %v1273 = vunpack.c.l.b16 %v761
      %v1274 = vunpack.c.l.b16 %v762
      %v1275 = vunpack.c.l.b16 %v763
      %v1276 = vunpack.c.l.b16 %v764
      %v1277 = vunpack.c.l.b16 %v765
      %v1278 = vunpack.c.l.b16 %v766
      %v1279 = vunpack.c.l.b16 %v767
      %v1280 = vunpack.c.l.b16 %v768
      %v1281 = vunpack.c.l.b16 %v769
      %v1282 = vunpack.c.l.b16 %v770
      %v1283 = vunpack.c.l.b16 %v771
      %v1284 = vunpack.c.l.b16 %v772
      %v1285 = vunpack.c.l.b16 %v773
      %v1286 = vunpack.c.l.b16 %v774
      %v1287 = vunpack.c.l.b16 %v775
      %v1288 = vunpack.c.l.b16 %v776
      %v1289 = vunpack.c.l.b16 %v777
      %v1290 = vunpack.c.l.b16 %v778
      %v1291 = vunpack.c.l.b16 %v779
      %v1292 = vunpack.c.l.b16 %v780
      %v1293 = vunpack.c.l.b16 %v781
      %v1294 = vunpack.c.l.b16 %v782
      %v1295 = vunpack.c.l.b16 %v783
      %v1296 = vunpack.c.l.b16 %v784
      %v1297 = vunpack.c.l.b16 %v785
      %v1298 = vunpack.c.l.b16 %v786
      %v1299 = vunpack.c.l.b16 %v787
      %v1300 = vunpack.c.l.b16 %v788
      %v1301 = vunpack.c.l.b16 %v789
      %v1302 = vunpack.c.l.b16 %v790
      %v1303 = vunpack.c.l.b16 %v791
      %v1304 = vunpack.c.l.b16 %v792
      %v1305 = vunpack.c.l.b16 %v793
      %v1306 = vunpack.c.l.b16 %v794
      %v1307 = vunpack.c.l.b16 %v795
      %v1308 = vunpack.c.l.b16 %v796
      %v1309 = vunpack.c.l.b16 %v797
      %v1310 = vunpack.c.l.b16 %v798
      %v1311 = vunpack.c.l.b16 %v799
      %v1312 = vunpack.c.l.b16 %v800
      %v1313 = vunpack.c.l.b16 %v801
      %v1314 = vunpack.c.l.b16 %v802
      %v1315 = vunpack.c.l.b16 %v803
      %v1316 = vunpack.c.l.b16 %v804
      %v1317 = vunpack.c.l.b16 %v805
      %v1318 = vunpack.c.l.b16 %v806
      %v1319 = vunpack.c.l.b16 %v807
      %v1320 = vunpack.c.l.b16 %v808
      %v1321 = vunpack.c.l.b16 %v809
      %v1322 = vunpack.c.l.b16 %v810
      %v1323 = vunpack.c.l.b16 %v811
      %v1324 = vunpack.c.l.b16 %v812
      %v1325 = vunpack.c.l.b16 %v813
      %v1326 = vunpack.c.l.b16 %v814
      %v1327 = vunpack.c.l.b16 %v815
      %v1328 = vunpack.c.l.b16 %v816
      %v1329 = vunpack.c.l.b16 %v817
      %v1330 = vunpack.c.l.b16 %v818
      %v1331 = vunpack.c.l.b16 %v819
      %v1332 = vunpack.c.l.b16 %v820
      %v1333 = vunpack.c.l.b16 %v821
      %v1334 = vunpack.c.l.b16 %v822
      %v1335 = vunpack.c.l.b16 %v823
      %v1336 = vunpack.c.l.b16 %v824
      %v1337 = vunpack.c.l.b16 %v825
      %v1338 = vunpack.c.l.b16 %v826
      %v1339 = vunpack.c.l.b16 %v827
      %v1340 = vunpack.c.l.b16 %v828
      %v1341 = vunpack.c.l.b16 %v829
      %v1342 = vunpack.c.l.b16 %v830
      %v1343 = vunpack.c.l.b16 %v831
      %v1344 = vunpack.c.l.b16 %v832
      %v1345 = vunpack.c.l.b16 %v833
      %v1346 = vunpack.c.l.b16 %v834
      %v1347 = vunpack.c.l.b16 %v835
      %v1348 = vunpack.c.l.b16 %v836
      %v1349 = vunpack.c.l.b16 %v837
      %v1350 = vunpack.c.l.b16 %v838
      %v1351 = vunpack.c.l.b16 %v839
      %v1352 = vunpack.c.l.b16 %v840
      %v1353 = vunpack.c.l.b16 %v841
      %v1354 = vunpack.c.l.b16 %v842
      %v1355 = vunpack.c.l.b16 %v843
      %v1356 = vunpack.c.l.b16 %v844
      %v1357 = vunpack.c.l.b16 %v845
      %v1358 = vunpack.c.l.b16 %v846
      %v1359 = vunpack.c.l.b16 %v847
      %v1360 = vunpack.c.l.b16 %v848
      %v1361 = vunpack.c.l.b16 %v849
      %v1362 = vunpack.c.l.b16 %v850
      %v1363 = vunpack.c.l.b16 %v851
      %v1364 = vunpack.c.l.b16 %v852
      %v1365 = vunpack.c.l.b16 %v853
      %v1366 = vunpack.c.l.b16 %v854
      %v1367 = vunpack.c.l.b16 %v855
      %v1368 = vunpack.c.l.b16 %v856
      %v1369 = vunpack.c.l.b16 %v857
      %v1370 = vunpack.c.l.b16 %v858
      %v1371 = vunpack.c.l.b16 %v859
      %v1372 = vunpack.c.l.b16 %v860
      %v1373 = vunpack.c.l.b16 %v861
      %v1374 = vunpack.c.l.b16 %v862
      %v1375 = vunpack.c.l.b16 %v863
      %v1376 = vunpack.c.l.b16 %v864
      %v1377 = vunpack.c.l.b16 %v865
      %v1378 = vunpack.c.l.b16 %v866
      %v1379 = vunpack.c.l.b16 %v867
      %v1380 = vunpack.c.l.b16 %v868
      %v1381 = vunpack.c.l.b16 %v869
      %v1382 = vunpack.c.l.b16 %v870
      %v1383 = vunpack.c.l.b16 %v871
      %v1384 = vunpack.c.l.b16 %v872
      %v1385 = vunpack.c.l.b16 %v873
      %v1386 = vunpack.c.l.b16 %v874
      %v1387 = vunpack.c.l.b16 %v875
      %v1388 = vunpack.c.l.b16 %v876
      %v1389 = vunpack.c.l.b16 %v877
      %v1390 = vunpack.c.l.b16 %v878
      %v1391 = vunpack.c.l.b16 %v879
      %v1392 = vunpack.c.l.b16 %v880
      %v1393 = vunpack.c.l.b16 %v881
      %v1394 = vunpack.c.l.b16 %v882
      %v1395 = vunpack.c.l.b16 %v883
      %v1396 = vunpack.c.l.b16 %v884
      %v1397 = vunpack.c.l.b16 %v885
      %v1398 = vunpack.c.l.b16 %v886
      %v1399 = vunpack.c.l.b16 %v887
      %v1400 = vunpack.c.l.b16 %v888
      %v1401 = vunpack.c.l.b16 %v889
      %v1402 = vunpack.c.l.b16 %v890
      %v1403 = vunpack.c.l.b16 %v891
      %v1404 = vunpack.c.l.b16 %v892
      %v1405 = vunpack.c.l.b16 %v893
      %v1406 = vunpack.c.l.b16 %v894
      %v1407 = vunpack.c.l.b16 %v895
      %v1408 = vunpack.c.l.b16 %v896
      %v1409 = vunpack.c.l.b16 %v897
      %v1410 = vunpack.c.l.b16 %v898
      %v1411 = vunpack.c.l.b16 %v899
      %v1412 = vunpack.c.l.b16 %v900
      %v1413 = vunpack.c.l.b16 %v901
      %v1414 = vunpack.c.l.b16 %v902
      %v1415 = vunpack.c.l.b16 %v903
      %v1416 = vunpack.c.l.b16 %v904
      %v1417 = vunpack.c.l.b16 %v905
      %v1418 = vunpack.c.l.b16 %v906
      %v1419 = vunpack.c.l.b16 %v907
      %v1420 = vunpack.c.l.b16 %v908
      %v1421 = vunpack.c.l.b16 %v909
      %v1422 = vunpack.c.l.b16 %v910
      %v1423 = vunpack.c.l.b16 %v911
      %v1424 = vunpack.c.l.b16 %v912
      %v1425 = vunpack.c.l.b16 %v913
      %v1426 = vunpack.c.l.b16 %v914
      %v1427 = vunpack.c.l.b16 %v915
      %v1428 = vunpack.c.l.b16 %v916
      %v1429 = vunpack.c.l.b16 %v917
      %v1430 = vunpack.c.l.b16 %v918
      %v1431 = vunpack.c.l.b16 %v919
      %v1432 = vunpack.c.l.b16 %v920
      %v1433 = vunpack.c.l.b16 %v921
      %v1434 = vunpack.c.l.b16 %v922
      %v1435 = vunpack.c.l.b16 %v923
      %v1436 = vunpack.c.l.b16 %v924
      %v1437 = vunpack.c.l.b16 %v925
      %v1438 = vunpack.c.l.b16 %v926
      %v1439 = vunpack.c.l.b16 %v927
      %v1440 = vunpack.c.l.b16 %v928
      %v1441 = vunpack.c.l.b16 %v929
      %v1442 = vunpack.c.l.b16 %v930
      %v1443 = vunpack.c.l.b16 %v931
      %v1444 = vunpack.c.l.b16 %v932
      %v1445 = vunpack.c.l.b16 %v933
      %v1446 = vunpack.c.l.b16 %v934
      %v1447 = vunpack.c.l.b16 %v935
      %v1448 = vunpack.c.l.b16 %v936
      %v1449 = vunpack.c.l.b16 %v937
      %v1450 = vunpack.c.l.b16 %v938
      %v1451 = vunpack.c.l.b16 %v939
      %v1452 = vunpack.c.l.b16 %v940
      %v1453 = vunpack.c.l.b16 %v941
      %v1454 = vpack.c.b16 %v1199, %v1198
      %v1455 = vpack.c.b16 %v1201, %v1200
      %v1456 = vpack.c.b16 %v1203, %v1202
      %v1457 = vpack.c.b16 %v1205, %v1204
      %v1458 = vpack.c.b16 %v1207, %v1206
      %v1459 = vpack.c.b16 %v1209, %v1208
      %v1460 = vpack.c.b16 %v1211, %v1210
      %v1461 = vpack.c.b16 %v1213, %v1212
      %v1462 = vpack.c.b16 %v1215, %v1214
      %v1463 = vpack.c.b16 %v1217, %v1216
      %v1464 = vpack.c.b16 %v1219, %v1218
      %v1465 = vpack.c.b16 %v1221, %v1220
      %v1466 = vpack.c.b16 %v1223, %v1222
      %v1467 = vpack.c.b16 %v1225, %v1224
      %v1468 = vpack.c.b16 %v1227, %v1226
      %v1469 = vpack.c.b16 %v1229, %v1228
      %v1470 = vpack.c.b16 %v1231, %v1230
      %v1471 = vpack.c.b16 %v1233, %v1232
      %v1472 = vpack.c.b16 %v1235, %v1234
      %v1473 = vpack.c.b16 %v1237, %v1236
      %v1474 = vpack.c.b16 %v1239, %v1238
      %v1475 = vpack.c.b16 %v1241, %v1240
      %v1476 = vpack.c.b16 %v1243, %v1242
      %v1477 = vpack.c.b16 %v1245, %v1244
      %v1478 = vpack.c.b16 %v1247, %v1246
      %v1479 = vpack.c.b16 %v1249, %v1248
      %v1480 = vpack.c.b16 %v1251, %v1250
      %v1481 = vpack.c.b16 %v1253, %v1252
      %v1482 = vpack.c.b16 %v1255, %v1254
      %v1483 = vpack.c.b16 %v1257, %v1256
      %v1484 = vpack.c.b16 %v1259, %v1258
      %v1485 = vpack.c.b16 %v1261, %v1260
      %v1486 = vpack.c.b16 %v1263, %v1262
      %v1487 = vpack.c.b16 %v1265, %v1264
      %v1488 = vpack.c.b16 %v1267, %v1266
      %v1489 = vpack.c.b16 %v1269, %v1268
      %v1490 = vpack.c.b16 %v1271, %v1270
      %v1491 = vpack.c.b16 %v1273, %v1272
      %v1492 = vpack.c.b16 %v1275, %v1274
      %v1493 = vpack.c.b16 %v1277, %v1276
      %v1494 = vpack.c.b16 %v1279, %v1278
      %v1495 = vpack.c.b16 %v1281, %v1280
      %v1496 = vpack.c.b16 %v1283, %v1282
      %v1497 = vpack.c.b16 %v1285, %v1284
      %v1498 = vpack.c.b16 %v1287, %v1286
      %v1499 = vpack.c.b16 %v1289, %v1288
      %v1500 = vpack.c.b16 %v1291, %v1290
      %v1501 = vpack.c.b16 %v1293, %v1292
      %v1502 = vpack.c.b16 %v1295, %v1294
      %v1503 = vpack.c.b16 %v1297, %v1296
      %v1504 = vpack.c.b16 %v1299, %v1298
      %v1505 = vpack.c.b16 %v1301, %v1300
      %v1506 = vpack.c.b16 %v1303, %v1302
      %v1507 = vpack.c.b16 %v1305, %v1304
      %v1508 = vpack.c.b16 %v1307, %v1306
      %v1509 = vpack.c.b16 %v1309, %v1308
      %v1510 = vpack.c.b16 %v1311, %v1310
      %v1511 = vpack.c.b16 %v1313, %v1312
      %v1512 = vpack.c.b16 %v1315, %v1314
      %v1513 = vpack.c.b16 %v1317, %v1316
      %v1514 = vpack.c.b16 %v1319, %v1318
      %v1515 = vpack.c.b16 %v1321, %v1320
      %v1516 = vpack.c.b16 %v1323, %v1322
      %v1517 = vpack.c.b16 %v1325, %v1324
      %v1518 = vpack.c.b16 %v1327, %v1326
      %v1519 = vpack.c.b16 %v1329, %v1328
      %v1520 = vpack.c.b16 %v1331, %v1330
      %v1521 = vpack.c.b16 %v1333, %v1332
      %v1522 = vpack.c.b16 %v1335, %v1334
      %v1523 = vpack.c.b16 %v1337, %v1336
      %v1524 = vpack.c.b16 %v1339, %v1338
      %v1525 = vpack.c.b16 %v1341, %v1340
      %v1526 = vpack.c.b16 %v1343, %v1342
      %v1527 = vpack.c.b16 %v1345, %v1344
      %v1528 = vpack.c.b16 %v1347, %v1346
      %v1529 = vpack.c.b16 %v1349, %v1348
      %v1530 = vpack.c.b16 %v1351, %v1350
      %v1531 = vpack.c.b16 %v1353, %v1352
      %v1532 = vpack.c.b16 %v1355, %v1354
      %v1533 = vpack.c.b16 %v1357, %v1356
      %v1534 = vpack.c.b16 %v1359, %v1358
      %v1535 = vpack.c.b16 %v1361, %v1360
      %v1536 = vpack.c.b16 %v1363, %v1362
      %v1537 = vpack.c.b16 %v1365, %v1364
      %v1538 = vpack.c.b16 %v1367, %v1366
      %v1539 = vpack.c.b16 %v1369, %v1368
      %v1540 = vpack.c.b16 %v1371, %v1370
      %v1541 = vpack.c.b16 %v1373, %v1372
      %v1542 = vpack.c.b16 %v1375, %v1374
      %v1543 = vpack.c.b16 %v1377, %v1376
      %v1544 = vpack.c.b16 %v1379, %v1378
      %v1545 = vpack.c.b16 %v1381, %v1380
      %v1546 = vpack.c.b16 %v1383, %v1382
      %v1547 = vpack.c.b16 %v1385, %v1384
      %v1548 = vpack.c.b16 %v1387, %v1386
      %v1549 = vpack.c.b16 %v1389, %v1388
      %v1550 = vpack.c.b16 %v1391, %v1390
      %v1551 = vpack.c.b16 %v1393, %v1392
      %v1552 = vpack.c.b16 %v1395, %v1394
      %v1553 = vpack.c.b16 %v1397, %v1396
      %v1554 = vpack.c.b16 %v1399, %v1398
      %v1555 = vpack.c.b16 %v1401, %v1400
      %v1556 = vpack.c.b16 %v1403, %v1402
      %v1557 = vpack.c.b16 %v1405, %v1404
      %v1558 = vpack.c.b16 %v1407, %v1406
      %v1559 = vpack.c.b16 %v1409, %v1408
      %v1560 = vpack.c.b16 %v1411, %v1410
      %v1561 = vpack.c.b16 %v1413, %v1412
      %v1562 = vpack.c.b16 %v1415, %v1414
      %v1563 = vpack.c.b16 %v1417, %v1416
      %v1564 = vpack.c.b16 %v1419, %v1418
      %v1565 = vpack.c.b16 %v1421, %v1420
      %v1566 = vpack.c.b16 %v1423, %v1422
      %v1567 = vpack.c.b16 %v1425, %v1424
      %v1568 = vpack.c.b16 %v1427, %v1426
      %v1569 = vpack.c.b16 %v1429, %v1428
      %v1570 = vpack.c.b16 %v1431, %v1430
      %v1571 = vpack.c.b16 %v1433, %v1432
      %v1572 = vpack.c.b16 %v1435, %v1434
      %v1573 = vpack.c.b16 %v1437, %v1436
      %v1574 = vpack.c.b16 %v1439, %v1438
      %v1575 = vpack.c.b16 %v1441, %v1440
      %v1576 = vpack.c.b16 %v1443, %v1442
      %v1577 = vpack.c.b16 %v1445, %v1444
      %v1578 = vpack.c.b16 %v1447, %v1446
      %v1579 = vpack.c.b16 %v1449, %v1448
      %v1580 = vpack.c.b16 %v1451, %v1450
      %v1581 = vpack.c.b16 %v1453, %v1452
      %1710 = vmatprep.subr.bf16.mxu0 0
      %1711 = vmatpush1.bf16.msra.mxu0 %v1454
      %1712 = vmatprep.subr.bf16.mxu0 0
      %1713 = vmatpush1.bf16.msra.mxu0 %v1455
      %1714 = vmatprep.subr.bf16.mxu0 0
      %1715 = vmatpush1.bf16.msra.mxu0 %v1456
      %1716 = vmatprep.subr.bf16.mxu0 0
      %1717 = vmatpush1.bf16.msra.mxu0 %v1457
      %1718 = vmatprep.subr.bf16.mxu0 0
      %1719 = vmatpush1.bf16.msra.mxu0 %v1458
      %1720 = vmatprep.subr.bf16.mxu0 0
      %1721 = vmatpush1.bf16.msra.mxu0 %v1459
      %1722 = vmatprep.subr.bf16.mxu0 0
      %1723 = vmatpush1.bf16.msra.mxu0 %v1460
      %1724 = vmatprep.subr.bf16.mxu0 0
      %1725 = vmatpush1.bf16.msra.mxu0 %v1461
      %1726 = vmatprep.subr.bf16.mxu0 0
      %1727 = vmatpush1.bf16.msra.mxu0 %v1462
      %1728 = vmatprep.subr.bf16.mxu0 0
      %1729 = vmatpush1.bf16.msra.mxu0 %v1463
      %1730 = vmatprep.subr.bf16.mxu0 0
      %1731 = vmatpush1.bf16.msra.mxu0 %v1464
      %1732 = vmatprep.subr.bf16.mxu0 0
      %1733 = vmatpush1.bf16.msra.mxu0 %v1465
      %1734 = vmatprep.subr.bf16.mxu0 0
      %1735 = vmatpush1.bf16.msra.mxu0 %v1466
      %1736 = vmatprep.subr.bf16.mxu0 0
      %1737 = vmatpush1.bf16.msra.mxu0 %v1467
      %1738 = vmatprep.subr.bf16.mxu0 0
      %1739 = vmatpush1.bf16.msra.mxu0 %v1468
      %1740 = vmatprep.subr.bf16.mxu0 0
      %1741 = vmatpush1.bf16.msra.mxu0 %v1469
      %1742 = vmatprep.mubr.bf16.mxu0 %v671
      %1743 = vmatmul.mubr.bf16.gmra.mrb[0].mxu0 %v670
      %v1744 = vpop.f32.mrb[0].mxu0
      %v1745 = vadd.f32 0.0, %v1744
      %v1746 = vpop.f32.mrb[0].mxu0
      %v1747 = vpop.f32.mrb[0].mxu0
      %v1748 = vpop.f32.mrb[0].mxu0
      %1749 = vdwg.mxu0
      %1750 = vmatprep.subr.bf16.mxu0 0
      %1751 = vmatpush1.bf16.msra.mxu0 %v1470
      %1752 = vmatprep.subr.bf16.mxu0 0
      %1753 = vmatpush1.bf16.msra.mxu0 %v1471
      %1754 = vmatprep.subr.bf16.mxu0 0
      %1755 = vmatpush1.bf16.msra.mxu0 %v1472
      %1756 = vmatprep.subr.bf16.mxu0 0
      %1757 = vmatpush1.bf16.msra.mxu0 %v1473
      %1758 = vmatprep.subr.bf16.mxu0 0
      %1759 = vmatpush1.bf16.msra.mxu0 %v1474
      %1760 = vmatprep.subr.bf16.mxu0 0
      %1761 = vmatpush1.bf16.msra.mxu0 %v1475
      %1762 = vmatprep.subr.bf16.mxu0 0
      %1763 = vmatpush1.bf16.msra.mxu0 %v1476
      %1764 = vmatprep.subr.bf16.mxu0 0
      %1765 = vmatpush1.bf16.msra.mxu0 %v1477
      %1766 = vmatprep.subr.bf16.mxu0 0
      %1767 = vmatpush1.bf16.msra.mxu0 %v1478
      %1768 = vmatprep.subr.bf16.mxu0 0
      %1769 = vmatpush1.bf16.msra.mxu0 %v1479
      %1770 = vmatprep.subr.bf16.mxu0 0
      %1771 = vmatpush1.bf16.msra.mxu0 %v1480
      %1772 = vmatprep.subr.bf16.mxu0 0
      %1773 = vmatpush1.bf16.msra.mxu0 %v1481
      %1774 = vmatprep.subr.bf16.mxu0 0
      %1775 = vmatpush1.bf16.msra.mxu0 %v1482
      %1776 = vmatprep.subr.bf16.mxu0 0
      %1777 = vmatpush1.bf16.msra.mxu0 %v1483
      %1778 = vmatprep.subr.bf16.mxu0 0
      %1779 = vmatpush1.bf16.msra.mxu0 %v1484
      %1780 = vmatprep.subr.bf16.mxu0 0
      %1781 = vmatpush1.bf16.msra.mxu0 %v1485
      %1782 = vmatprep.mubr.bf16.mxu0 %v673
      %1783 = vmatmul.mubr.bf16.gmra.mrb[0].mxu0 %v672
      %v1784 = vpop.f32.mrb[0].mxu0
      %v1785 = vadd.f32 %v1745, %v1784
      %v1786 = vpop.f32.mrb[0].mxu0
      %v1787 = vpop.f32.mrb[0].mxu0
      %v1788 = vpop.f32.mrb[0].mxu0
      %1789 = vdwg.mxu0
      %1790 = vmatprep.subr.bf16.mxu0 0
      %1791 = vmatpush1.bf16.msra.mxu0 %v1486
      %1792 = vmatprep.subr.bf16.mxu0 0
      %1793 = vmatpush1.bf16.msra.mxu0 %v1487
      %1794 = vmatprep.subr.bf16.mxu0 0
      %1795 = vmatpush1.bf16.msra.mxu0 %v1488
      %1796 = vmatprep.subr.bf16.mxu0 0
      %1797 = vmatpush1.bf16.msra.mxu0 %v1489
      %1798 = vmatprep.subr.bf16.mxu0 0
      %1799 = vmatpush1.bf16.msra.mxu0 %v1490
      %1800 = vmatprep.subr.bf16.mxu0 0
      %1801 = vmatpush1.bf16.msra.mxu0 %v1491
      %1802 = vmatprep.subr.bf16.mxu0 0
      %1803 = vmatpush1.bf16.msra.mxu0 %v1492
      %1804 = vmatprep.subr.bf16.mxu0 0
      %1805 = vmatpush1.bf16.msra.mxu0 %v1493
      %1806 = vmatprep.subr.bf16.mxu0 0
      %1807 = vmatpush1.bf16.msra.mxu0 %v1494
      %1808 = vmatprep.subr.bf16.mxu0 0
      %1809 = vmatpush1.bf16.msra.mxu0 %v1495
      %1810 = vmatprep.subr.bf16.mxu0 0
      %1811 = vmatpush1.bf16.msra.mxu0 %v1496
      %1812 = vmatprep.subr.bf16.mxu0 0
      %1813 = vmatpush1.bf16.msra.mxu0 %v1497
      %1814 = vmatprep.subr.bf16.mxu0 0
      %1815 = vmatpush1.bf16.msra.mxu0 %v1498
      %1816 = vmatprep.subr.bf16.mxu0 0
      %1817 = vmatpush1.bf16.msra.mxu0 %v1499
      %1818 = vmatprep.subr.bf16.mxu0 0
      %1819 = vmatpush1.bf16.msra.mxu0 %v1500
      %1820 = vmatprep.subr.bf16.mxu0 0
      %1821 = vmatpush1.bf16.msra.mxu0 %v1501
      %1822 = vmatprep.mubr.bf16.mxu0 %v675
      %1823 = vmatmul.mubr.bf16.gmra.mrb[0].mxu0 %v674
      %v1824 = vpop.f32.mrb[0].mxu0
      %v1825 = vadd.f32 %v1785, %v1824
      %v1826 = vpop.f32.mrb[0].mxu0
      %v1827 = vpop.f32.mrb[0].mxu0
      %v1828 = vpop.f32.mrb[0].mxu0
      %1829 = vdwg.mxu0
      %1830 = vmatprep.subr.bf16.mxu0 0
      %1831 = vmatpush1.bf16.msra.mxu0 %v1502
      %1832 = vmatprep.subr.bf16.mxu0 0
      %1833 = vmatpush1.bf16.msra.mxu0 %v1503
      %1834 = vmatprep.subr.bf16.mxu0 0
      %1835 = vmatpush1.bf16.msra.mxu0 %v1504
      %1836 = vmatprep.subr.bf16.mxu0 0
      %1837 = vmatpush1.bf16.msra.mxu0 %v1505
      %1838 = vmatprep.subr.bf16.mxu0 0
      %1839 = vmatpush1.bf16.msra.mxu0 %v1506
      %1840 = vmatprep.subr.bf16.mxu0 0
      %1841 = vmatpush1.bf16.msra.mxu0 %v1507
      %1842 = vmatprep.subr.bf16.mxu0 0
      %1843 = vmatpush1.bf16.msra.mxu0 %v1508
      %1844 = vmatprep.subr.bf16.mxu0 0
      %1845 = vmatpush1.bf16.msra.mxu0 %v1509
      %1846 = vmatprep.subr.bf16.mxu0 0
      %1847 = vmatpush1.bf16.msra.mxu0 %v1510
      %1848 = vmatprep.subr.bf16.mxu0 0
      %1849 = vmatpush1.bf16.msra.mxu0 %v1511
      %1850 = vmatprep.subr.bf16.mxu0 0
      %1851 = vmatpush1.bf16.msra.mxu0 %v1512
      %1852 = vmatprep.subr.bf16.mxu0 0
      %1853 = vmatpush1.bf16.msra.mxu0 %v1513
      %1854 = vmatprep.subr.bf16.mxu0 0
      %1855 = vmatpush1.bf16.msra.mxu0 %v1514
      %1856 = vmatprep.subr.bf16.mxu0 0
      %1857 = vmatpush1.bf16.msra.mxu0 %v1515
      %1858 = vmatprep.subr.bf16.mxu0 0
      %1859 = vmatpush1.bf16.msra.mxu0 %v1516
      %1860 = vmatprep.subr.bf16.mxu0 0
      %1861 = vmatpush1.bf16.msra.mxu0 %v1517
      %1862 = vmatprep.mubr.bf16.mxu0 %v677
      %1863 = vmatmul.mubr.bf16.gmra.mrb[0].mxu0 %v676
      %v1864 = vpop.f32.mrb[0].mxu0
      %v1865 = vadd.f32 %v1825, %v1864
      %v1866 = vpop.f32.mrb[0].mxu0
      %v1867 = vpop.f32.mrb[0].mxu0
      %v1868 = vpop.f32.mrb[0].mxu0
      %1869 = vdwg.mxu0
      %1870 = vmatprep.subr.bf16.mxu0 0
      %1871 = vmatpush1.bf16.msra.mxu0 %v1518
      %1872 = vmatprep.subr.bf16.mxu0 0
      %1873 = vmatpush1.bf16.msra.mxu0 %v1519
      %1874 = vmatprep.subr.bf16.mxu0 0
      %1875 = vmatpush1.bf16.msra.mxu0 %v1520
      %1876 = vmatprep.subr.bf16.mxu0 0
      %1877 = vmatpush1.bf16.msra.mxu0 %v1521
      %1878 = vmatprep.subr.bf16.mxu0 0
      %1879 = vmatpush1.bf16.msra.mxu0 %v1522
      %1880 = vmatprep.subr.bf16.mxu0 0
      %1881 = vmatpush1.bf16.msra.mxu0 %v1523
      %1882 = vmatprep.subr.bf16.mxu0 0
      %1883 = vmatpush1.bf16.msra.mxu0 %v1524
      %1884 = vmatprep.subr.bf16.mxu0 0
      %1885 = vmatpush1.bf16.msra.mxu0 %v1525
      %1886 = vmatprep.subr.bf16.mxu0 0
      %1887 = vmatpush1.bf16.msra.mxu0 %v1526
      %1888 = vmatprep.subr.bf16.mxu0 0
      %1889 = vmatpush1.bf16.msra.mxu0 %v1527
      %1890 = vmatprep.subr.bf16.mxu0 0
      %1891 = vmatpush1.bf16.msra.mxu0 %v1528
      %1892 = vmatprep.subr.bf16.mxu0 0
      %1893 = vmatpush1.bf16.msra.mxu0 %v1529
      %1894 = vmatprep.subr.bf16.mxu0 0
      %1895 = vmatpush1.bf16.msra.mxu0 %v1530
      %1896 = vmatprep.subr.bf16.mxu0 0
      %1897 = vmatpush1.bf16.msra.mxu0 %v1531
      %1898 = vmatprep.subr.bf16.mxu0 0
      %1899 = vmatpush1.bf16.msra.mxu0 %v1532
      %1900 = vmatprep.subr.bf16.mxu0 0
      %1901 = vmatpush1.bf16.msra.mxu0 %v1533
      %1902 = vmatprep.mubr.bf16.mxu0 %v679
      %1903 = vmatmul.mubr.bf16.gmra.mrb[0].mxu0 %v678
      %v1904 = vpop.f32.mrb[0].mxu0
      %v1905 = vadd.f32 %v1865, %v1904
      %v1906 = vpop.f32.mrb[0].mxu0
      %v1907 = vpop.f32.mrb[0].mxu0
      %v1908 = vpop.f32.mrb[0].mxu0
      %1909 = vdwg.mxu0
      %1910 = vmatprep.subr.bf16.mxu0 0
      %1911 = vmatpush1.bf16.msra.mxu0 %v1534
      %1912 = vmatprep.subr.bf16.mxu0 0
      %1913 = vmatpush1.bf16.msra.mxu0 %v1535
      %1914 = vmatprep.subr.bf16.mxu0 0
      %1915 = vmatpush1.bf16.msra.mxu0 %v1536
      %1916 = vmatprep.subr.bf16.mxu0 0
      %1917 = vmatpush1.bf16.msra.mxu0 %v1537
      %1918 = vmatprep.subr.bf16.mxu0 0
      %1919 = vmatpush1.bf16.msra.mxu0 %v1538
      %1920 = vmatprep.subr.bf16.mxu0 0
      %1921 = vmatpush1.bf16.msra.mxu0 %v1539
      %1922 = vmatprep.subr.bf16.mxu0 0
      %1923 = vmatpush1.bf16.msra.mxu0 %v1540
      %1924 = vmatprep.subr.bf16.mxu0 0
      %1925 = vmatpush1.bf16.msra.mxu0 %v1541
      %1926 = vmatprep.subr.bf16.mxu0 0
      %1927 = vmatpush1.bf16.msra.mxu0 %v1542
      %1928 = vmatprep.subr.bf16.mxu0 0
      %1929 = vmatpush1.bf16.msra.mxu0 %v1543
      %1930 = vmatprep.subr.bf16.mxu0 0
      %1931 = vmatpush1.bf16.msra.mxu0 %v1544
      %1932 = vmatprep.subr.bf16.mxu0 0
      %1933 = vmatpush1.bf16.msra.mxu0 %v1545
      %1934 = vmatprep.subr.bf16.mxu0 0
      %1935 = vmatpush1.bf16.msra.mxu0 %v1546
      %1936 = vmatprep.subr.bf16.mxu0 0
      %1937 = vmatpush1.bf16.msra.mxu0 %v1547
      %1938 = vmatprep.subr.bf16.mxu0 0
      %1939 = vmatpush1.bf16.msra.mxu0 %v1548
      %1940 = vmatprep.subr.bf16.mxu0 0
      %1941 = vmatpush1.bf16.msra.mxu0 %v1549
      %1942 = vmatprep.mubr.bf16.mxu0 %v681
      %1943 = vmatmul.mubr.bf16.gmra.mrb[0].mxu0 %v680
      %v1944 = vpop.f32.mrb[0].mxu0
      %v1945 = vadd.f32 %v1905, %v1944
      %v1946 = vpop.f32.mrb[0].mxu0
      %v1947 = vpop.f32.mrb[0].mxu0
      %v1948 = vpop.f32.mrb[0].mxu0
      %1949 = vdwg.mxu0
      %1950 = vmatprep.subr.bf16.mxu0 0
      %1951 = vmatpush1.bf16.msra.mxu0 %v1550
      %1952 = vmatprep.subr.bf16.mxu0 0
      %1953 = vmatpush1.bf16.msra.mxu0 %v1551
      %1954 = vmatprep.subr.bf16.mxu0 0
      %1955 = vmatpush1.bf16.msra.mxu0 %v1552
      %1956 = vmatprep.subr.bf16.mxu0 0
      %1957 = vmatpush1.bf16.msra.mxu0 %v1553
      %1958 = vmatprep.subr.bf16.mxu0 0
      %1959 = vmatpush1.bf16.msra.mxu0 %v1554
      %1960 = vmatprep.subr.bf16.mxu0 0
      %1961 = vmatpush1.bf16.msra.mxu0 %v1555
      %1962 = vmatprep.subr.bf16.mxu0 0
      %1963 = vmatpush1.bf16.msra.mxu0 %v1556
      %1964 = vmatprep.subr.bf16.mxu0 0
      %1965 = vmatpush1.bf16.msra.mxu0 %v1557
      %1966 = vmatprep.subr.bf16.mxu0 0
      %1967 = vmatpush1.bf16.msra.mxu0 %v1558
      %1968 = vmatprep.subr.bf16.mxu0 0
      %1969 = vmatpush1.bf16.msra.mxu0 %v1559
      %1970 = vmatprep.subr.bf16.mxu0 0
      %1971 = vmatpush1.bf16.msra.mxu0 %v1560
      %1972 = vmatprep.subr.bf16.mxu0 0
      %1973 = vmatpush1.bf16.msra.mxu0 %v1561
      %1974 = vmatprep.subr.bf16.mxu0 0
      %1975 = vmatpush1.bf16.msra.mxu0 %v1562
      %1976 = vmatprep.subr.bf16.mxu0 0
      %1977 = vmatpush1.bf16.msra.mxu0 %v1563
      %1978 = vmatprep.subr.bf16.mxu0 0
      %1979 = vmatpush1.bf16.msra.mxu0 %v1564
      %1980 = vmatprep.subr.bf16.mxu0 0
      %1981 = vmatpush1.bf16.msra.mxu0 %v1565
      %1982 = vmatprep.mubr.bf16.mxu0 %v683
      %1983 = vmatmul.mubr.bf16.gmra.mrb[0].mxu0 %v682
      %v1984 = vpop.f32.mrb[0].mxu0
      %v1985 = vadd.f32 %v1945, %v1984
      %v1986 = vpop.f32.mrb[0].mxu0
      %v1987 = vpop.f32.mrb[0].mxu0
      %v1988 = vpop.f32.mrb[0].mxu0
      %1989 = vdwg.mxu0
      %1990 = vmatprep.subr.bf16.mxu0 0
      %1991 = vmatpush1.bf16.msra.mxu0 %v1566
      %1992 = vmatprep.subr.bf16.mxu0 0
      %1993 = vmatpush1.bf16.msra.mxu0 %v1567
      %1994 = vmatprep.subr.bf16.mxu0 0
      %1995 = vmatpush1.bf16.msra.mxu0 %v1568
      %1996 = vmatprep.subr.bf16.mxu0 0
      %1997 = vmatpush1.bf16.msra.mxu0 %v1569
      %1998 = vmatprep.subr.bf16.mxu0 0
      %1999 = vmatpush1.bf16.msra.mxu0 %v1570
      %2000 = vmatprep.subr.bf16.mxu0 0
      %2001 = vmatpush1.bf16.msra.mxu0 %v1571
      %2002 = vmatprep.subr.bf16.mxu0 0
      %2003 = vmatpush1.bf16.msra.mxu0 %v1572
      %2004 = vmatprep.subr.bf16.mxu0 0
      %2005 = vmatpush1.bf16.msra.mxu0 %v1573
      %2006 = vmatprep.subr.bf16.mxu0 0
      %2007 = vmatpush1.bf16.msra.mxu0 %v1574
      %2008 = vmatprep.subr.bf16.mxu0 0
      %2009 = vmatpush1.bf16.msra.mxu0 %v1575
      %2010 = vmatprep.subr.bf16.mxu0 0
      %2011 = vmatpush1.bf16.msra.mxu0 %v1576
      %2012 = vmatprep.subr.bf16.mxu0 0
      %2013 = vmatpush1.bf16.msra.mxu0 %v1577
      %2014 = vmatprep.subr.bf16.mxu0 0
      %2015 = vmatpush1.bf16.msra.mxu0 %v1578
      %2016 = vmatprep.subr.bf16.mxu0 0
      %2017 = vmatpush1.bf16.msra.mxu0 %v1579
      %2018 = vmatprep.subr.bf16.mxu0 0
      %2019 = vmatpush1.bf16.msra.mxu0 %v1580
      %2020 = vmatprep.subr.bf16.mxu0 0
      %2021 = vmatpush1.bf16.msra.mxu0 %v1581
      %2022 = vmatprep.mubr.bf16.mxu0 %v685
      %2023 = vmatmul.mubr.bf16.gmra.mrb[0].mxu0 %v684
      %v2024 = vpop.f32.mrb[0].mxu0
      %v2025 = vadd.f32 %v1985, %v2024
      %v2026 = vpop.f32.mrb[0].mxu0
      %v2027 = vpop.f32.mrb[0].mxu0
      %v2028 = vpop.f32.mrb[0].mxu0
      %2029 = vdwg.mxu0
      %v2030 = vmul.f32 %v2025, 0.0625
      %v2031 = vld [vmem:[%s2] sm:$0x1]
      %v2033 = vlaneseq
      %v2034 = vshrl.u32 %v2033, 7
      %v2035 = vsub.s32 0, %v2034
      %v2036 = vrot.slane %v2031, %v2035
      %v2038 = vadd.f32 %v2030, %v2036
      %2039 = vst [vmem:[%s3] sm:$0x3] %v2038
    $region25: #{clothnet_forward.1} parent=1 // pred_fallthru
      _
    // Predicated region
    $region26: #{clothnet_forward.1} parent=1 // pred_check
      _
    $region27: #{clothnet_forward.1} parent=1 // pred_check_branch
      %2041 = sbr.rel (0) target = $region29
    $region28: #{clothnet_forward.1} parent=1 // pred_region
      _
    $region29: #{clothnet_forward.1} parent=1 // pred_fallthru
      _
    // Predicated region
    $region30: #{clothnet_forward.1} parent=1 // pred_check
      _
    $region31: #{clothnet_forward.1} parent=1 // pred_check_branch
      %2043 = sbr.rel (0) target = $region33
    $region32: #{clothnet_forward.1} parent=1 // pred_region
      _
    $region33: #{clothnet_forward.1} parent=1 // pred_fallthru
      _
    %2044 = vsyncpa [#allocation4], 1

</llo_original>
